<compile_context>
chip_gen: v6e
topology: v6e:2x2x1
jax: 0.10.0
libtpu: 0.0.40
codegen_flags: <defaults>
</compile_context>

<pallas_src>
import math

import jax
import jax.numpy as jnp
from jax.experimental import pallas as pl
from jax.experimental.pallas import tpu as pltpu

D = 32          # input_size / output_size (hidden dim)
B = 8           # flattened batch size for the demo

_TAYLOR_ORDER = 16        # truncation error ~ ||dt*A||^(N+1)/(N+1)!  (<1e-9 for ||.||<=2)
_MAX_BATCH_TILE = 2048    # rows per grid step (sweepable; ~0.5 MB/buffer of VMEM)
_MIN_ROWS_FOR_SPLIT = 1024  # above this, force >= 2 tiles so v7x uses both TCs


def _round_up(x: int, m: int) -> int:
    return ((x + m - 1) // m) * m


def _linode_cell_kernel(dt_ref, pts_ref, x0_ref, out_ref):
    """One batch tile: xhat = sum_k dt^k * (x0 @ (A^k/k!)^T).

    Layouts:
      dt  -> (bt, 1)      f32  one scalar per batch row (sublane-major)
      pts -> (N, d, d)    f32  precomputed (A^k/k!)^T, resident across grid steps
      x0  -> (bt, d)      f32  feature dim on lanes
      out -> (bt, d)      f32
    """
    x0 = x0_ref[...]                                   # (bt, d)
    # Hoisted broadcast: one (bt,1)->(bt,d) expansion for the whole loop.
    dtb = jnp.broadcast_to(dt_ref[...], x0.shape)      # (bt, d)

    acc = x0                                           # k = 0 term (identity)
    dt_pow = dtb                                       # dt^1 replicated over lanes

    # 16 *independent* MXU matmuls (same LHS, different resident RHS) -> no
    # serial MXU dependency chain; VPU scale/accumulate overlaps with MXU.
    for k in range(_TAYLOR_ORDER):
        y = jnp.dot(x0, pts_ref[k], preferred_element_type=jnp.float32)  # (bt, d)
        acc = acc + dt_pow * y
        if k + 1 < _TAYLOR_ORDER:
            dt_pow = dt_pow * dtb                      # dt^(k+2), cheap VPU chain

    out_ref[...] = acc.astype(out_ref.dtype)


@jax.jit
def linode_cell_forward(dt, x0, weight, scalar):
    """[dt=(...,), x0=(..., d)] -> (..., d)   (LinODECell.forward)."""
    # kernel_parametrization = identity (default), so kernel = scalar * weight.
    kernel = (scalar * weight).astype(jnp.float32)
    d = x0.shape[-1]

    # Precompute transposed Taylor matrices P_k^T = (kernel^k / k!)^T once (tiny:
    # N * d * d * 4 bytes = 64 KB for d=32, N=16); resident in VMEM across tiles.
    powers = []
    p = jnp.eye(d, dtype=jnp.float32)
    for k in range(1, _TAYLOR_ORDER + 1):
        p = jnp.dot(p, kernel, preferred_element_type=jnp.float32) * jnp.float32(1.0 / k)
        powers.append(p.T)
    pts = jnp.stack(powers, axis=0)                    # (N, d, d)

    # PyTorch einsum broadcasting: output batch shape = broadcast(dt.shape, x0.shape[:-1]).
    dt = jnp.asarray(dt, jnp.float32)
    x0 = x0.astype(jnp.float32)
    batch_shape = jnp.broadcast_shapes(jnp.shape(dt), x0.shape[:-1])
    dt_b = jnp.broadcast_to(dt, batch_shape)
    x0_b = jnp.broadcast_to(x0, batch_shape + (d,))

    b = max(int(math.prod(batch_shape)), 1)
    dt2 = dt_b.reshape(b, 1)
    x02 = x0_b.reshape(b, d)

    # Batch tiling: no input padding — Pallas masks the ragged last block
    # (rows are independent, so garbage in masked rows never contaminates output).
    bt = min(_round_up(b, 8), _MAX_BATCH_TILE)
    if b >= _MIN_ROWS_FOR_SPLIT:
        # Ensure >= 2 balanced tiles so the "parallel" axis shards across both
        # v7x TensorCores (no-op cost on v5e/v6e single-core chips).
        bt = min(bt, _round_up((b + 1) // 2, 8))
    n_tiles = pl.cdiv(b, bt)

    out = pl.pallas_call(
        _linode_cell_kernel,
        out_shape=jax.ShapeDtypeStruct((b, d), jnp.float32),
        grid_spec=pltpu.PrefetchScalarGridSpec(
            num_scalar_prefetch=0,
            grid=(n_tiles,),
            in_specs=[
                pl.BlockSpec((bt, 1), lambda i: (i, 0)),                      # dt tile
                pl.BlockSpec((_TAYLOR_ORDER, d, d), lambda i: (0, 0, 0)),     # P_k^T, resident
                pl.BlockSpec((bt, d), lambda i: (i, 0)),                      # x0 tile
            ],
            out_specs=pl.BlockSpec((bt, d), lambda i: (i, 0)),
        ),
        compiler_params=pltpu.CompilerParams(
            dimension_semantics=("parallel",),
        ),
    )(dt2, pts, x02)

    return out.reshape(*batch_shape, d)


def _skew_symmetric_init(key, n):
    """Deterministic stand-in for linodenet's 'skew-symmetric' initialization."""
    a = jax.random.normal(key, (n, n), dtype=jnp.float32) / jnp.sqrt(jnp.float32(n))
    return (a - a.T) / jnp.sqrt(jnp.float32(2.0))


if __name__ == "__main__":
    key = jax.random.PRNGKey(0)
    k_w, k_dt, k_x = jax.random.split(key, 3)

    # Parameters (deterministic, synthetic).  Note: HP default scalar=0.0 would
    # make kernel==0 and expm==I; use scalar=1.0 to exercise a nontrivial path.
    weight = _skew_symmetric_init(k_w, D)                 # (D, D), skew-symmetric
    scalar = jnp.float32(1.0)

    # Inputs
    dt = jax.random.uniform(k_dt, (B,), dtype=jnp.float32, minval=0.05, maxval=0.5)
    x0 = jax.random.normal(k_x, (B, D), dtype=jnp.float32)

    xhat = linode_cell_forward(dt, x0, weight, scalar)
    jax.block_until_ready(xhat)

    # Reference: exact semantics with jax.scipy expm (matches torch.linalg.matrix_exp)
    kernel = scalar * weight
    Adt = dt[:, None, None] * kernel[None, :, :]
    expAdt = jax.vmap(jax.scipy.linalg.expm)(Adt)
    xhat_ref = jnp.einsum('bkl,bl->bk', expAdt, x0)

    assert xhat.shape == x0.shape
    max_err = jnp.max(jnp.abs(xhat - xhat_ref))
    assert jnp.allclose(xhat, xhat_ref, atol=1e-3, rtol=1e-3), (
        f"max abs err = {max_err}")

    print("KERNEL_OK")
</pallas_src>

<mosaic_0001>
module attributes {stable_mosaic.version = 11 : i64} {
  func.func @_linode_cell_kernel(%arg0: i32, %arg1: memref<8x1xf32, #tpu.memory_space<vmem>>, %arg2: memref<16x32x32xf32, #tpu.memory_space<vmem>>, %arg3: memref<8x32xf32, #tpu.memory_space<vmem>>, %arg4: memref<8x32xf32, #tpu.memory_space<vmem>>) attributes {dimension_semantics = [#tpu.dimension_semantics<parallel>], iteration_bounds = array<i64: 1>, scalar_prefetch = 0 : i64, scratch_operands = 0 : i64, tpu.core_type = #tpu.core_type<tc>, window_params = [{transform_indices = @transform_0, window_bounds = array<i64: 8, 1>}, {pipeline_mode = #tpu.pipeline_mode<synchronous>, transform_indices = @transform_1, window_bounds = array<i64: 16, 32, 32>}, {transform_indices = @transform_2, window_bounds = array<i64: 8, 32>}, {transform_indices = @transform_3, window_bounds = array<i64: 8, 32>}]} {
    %c0 = arith.constant 0 : index
    %c0_0 = arith.constant 0 : index
    %0 = vector.load %arg3[%c0, %c0_0] : memref<8x32xf32, #tpu.memory_space<vmem>>, vector<8x32xf32>
    %c0_1 = arith.constant 0 : index
    %c0_2 = arith.constant 0 : index
    %1 = vector.load %arg1[%c0_1, %c0_2] : memref<8x1xf32, #tpu.memory_space<vmem>>, vector<8x1xf32>
    %2 = vector.shape_cast %1 : vector<8x1xf32> to vector<8x1xf32>
    %3 = vector.broadcast %2 : vector<8x1xf32> to vector<8x32xf32>
    %c0_3 = arith.constant 0 : index
    %c0_4 = arith.constant 0 : index
    %c0_5 = arith.constant 0 : index
    %4 = vector.load %arg2[%c0_3, %c0_4, %c0_5] : memref<16x32x32xf32, #tpu.memory_space<vmem>>, vector<1x32x32xf32>
    %5 = vector.shape_cast %4 : vector<1x32x32xf32> to vector<32x32xf32>
    %cst = arith.constant dense<0.000000e+00> : vector<8x32xf32>
    %6 = tpu.matmul %0, %5, %cst {dimension_numbers = #tpu.dot_dimension_numbers<[1], [0], [0], [1], [0, 0, 1, 1], [], []>} : vector<8x32xf32>, vector<32x32xf32>, vector<8x32xf32> -> vector<8x32xf32>
    %7 = arith.mulf %3, %6 : vector<8x32xf32>
    %8 = arith.addf %0, %7 : vector<8x32xf32>
    %9 = arith.mulf %3, %3 : vector<8x32xf32>
    %c1 = arith.constant 1 : index
    %c0_6 = arith.constant 0 : index
    %c0_7 = arith.constant 0 : index
    %10 = vector.load %arg2[%c1, %c0_6, %c0_7] : memref<16x32x32xf32, #tpu.memory_space<vmem>>, vector<1x32x32xf32>
    %11 = vector.shape_cast %10 : vector<1x32x32xf32> to vector<32x32xf32>
    %cst_8 = arith.constant dense<0.000000e+00> : vector<8x32xf32>
    %12 = tpu.matmul %0, %11, %cst_8 {dimension_numbers = #tpu.dot_dimension_numbers<[1], [0], [0], [1], [0, 0, 1, 1], [], []>} : vector<8x32xf32>, vector<32x32xf32>, vector<8x32xf32> -> vector<8x32xf32>
    %13 = arith.mulf %9, %12 : vector<8x32xf32>
    %14 = arith.addf %8, %13 : vector<8x32xf32>
    %15 = arith.mulf %9, %3 : vector<8x32xf32>
    %c2 = arith.constant 2 : index
    %c0_9 = arith.constant 0 : index
    %c0_10 = arith.constant 0 : index
    %16 = vector.load %arg2[%c2, %c0_9, %c0_10] : memref<16x32x32xf32, #tpu.memory_space<vmem>>, vector<1x32x32xf32>
    %17 = vector.shape_cast %16 : vector<1x32x32xf32> to vector<32x32xf32>
    %cst_11 = arith.constant dense<0.000000e+00> : vector<8x32xf32>
    %18 = tpu.matmul %0, %17, %cst_11 {dimension_numbers = #tpu.dot_dimension_numbers<[1], [0], [0], [1], [0, 0, 1, 1], [], []>} : vector<8x32xf32>, vector<32x32xf32>, vector<8x32xf32> -> vector<8x32xf32>
    %19 = arith.mulf %15, %18 : vector<8x32xf32>
    %20 = arith.addf %14, %19 : vector<8x32xf32>
    %21 = arith.mulf %15, %3 : vector<8x32xf32>
    %c3 = arith.constant 3 : index
    %c0_12 = arith.constant 0 : index
    %c0_13 = arith.constant 0 : index
    %22 = vector.load %arg2[%c3, %c0_12, %c0_13] : memref<16x32x32xf32, #tpu.memory_space<vmem>>, vector<1x32x32xf32>
    %23 = vector.shape_cast %22 : vector<1x32x32xf32> to vector<32x32xf32>
    %cst_14 = arith.constant dense<0.000000e+00> : vector<8x32xf32>
    %24 = tpu.matmul %0, %23, %cst_14 {dimension_numbers = #tpu.dot_dimension_numbers<[1], [0], [0], [1], [0, 0, 1, 1], [], []>} : vector<8x32xf32>, vector<32x32xf32>, vector<8x32xf32> -> vector<8x32xf32>
    %25 = arith.mulf %21, %24 : vector<8x32xf32>
    %26 = arith.addf %20, %25 : vector<8x32xf32>
    %27 = arith.mulf %21, %3 : vector<8x32xf32>
    %c4 = arith.constant 4 : index
    %c0_15 = arith.constant 0 : index
    %c0_16 = arith.constant 0 : index
    %28 = vector.load %arg2[%c4, %c0_15, %c0_16] : memref<16x32x32xf32, #tpu.memory_space<vmem>>, vector<1x32x32xf32>
    %29 = vector.shape_cast %28 : vector<1x32x32xf32> to vector<32x32xf32>
    %cst_17 = arith.constant dense<0.000000e+00> : vector<8x32xf32>
    %30 = tpu.matmul %0, %29, %cst_17 {dimension_numbers = #tpu.dot_dimension_numbers<[1], [0], [0], [1], [0, 0, 1, 1], [], []>} : vector<8x32xf32>, vector<32x32xf32>, vector<8x32xf32> -> vector<8x32xf32>
    %31 = arith.mulf %27, %30 : vector<8x32xf32>
    %32 = arith.addf %26, %31 : vector<8x32xf32>
    %33 = arith.mulf %27, %3 : vector<8x32xf32>
    %c5 = arith.constant 5 : index
    %c0_18 = arith.constant 0 : index
    %c0_19 = arith.constant 0 : index
    %34 = vector.load %arg2[%c5, %c0_18, %c0_19] : memref<16x32x32xf32, #tpu.memory_space<vmem>>, vector<1x32x32xf32>
    %35 = vector.shape_cast %34 : vector<1x32x32xf32> to vector<32x32xf32>
    %cst_20 = arith.constant dense<0.000000e+00> : vector<8x32xf32>
    %36 = tpu.matmul %0, %35, %cst_20 {dimension_numbers = #tpu.dot_dimension_numbers<[1], [0], [0], [1], [0, 0, 1, 1], [], []>} : vector<8x32xf32>, vector<32x32xf32>, vector<8x32xf32> -> vector<8x32xf32>
    %37 = arith.mulf %33, %36 : vector<8x32xf32>
    %38 = arith.addf %32, %37 : vector<8x32xf32>
    %39 = arith.mulf %33, %3 : vector<8x32xf32>
    %c6 = arith.constant 6 : index
    %c0_21 = arith.constant 0 : index
    %c0_22 = arith.constant 0 : index
    %40 = vector.load %arg2[%c6, %c0_21, %c0_22] : memref<16x32x32xf32, #tpu.memory_space<vmem>>, vector<1x32x32xf32>
    %41 = vector.shape_cast %40 : vector<1x32x32xf32> to vector<32x32xf32>
    %cst_23 = arith.constant dense<0.000000e+00> : vector<8x32xf32>
    %42 = tpu.matmul %0, %41, %cst_23 {dimension_numbers = #tpu.dot_dimension_numbers<[1], [0], [0], [1], [0, 0, 1, 1], [], []>} : vector<8x32xf32>, vector<32x32xf32>, vector<8x32xf32> -> vector<8x32xf32>
    %43 = arith.mulf %39, %42 : vector<8x32xf32>
    %44 = arith.addf %38, %43 : vector<8x32xf32>
    %45 = arith.mulf %39, %3 : vector<8x32xf32>
    %c7 = arith.constant 7 : index
    %c0_24 = arith.constant 0 : index
    %c0_25 = arith.constant 0 : index
    %46 = vector.load %arg2[%c7, %c0_24, %c0_25] : memref<16x32x32xf32, #tpu.memory_space<vmem>>, vector<1x32x32xf32>
    %47 = vector.shape_cast %46 : vector<1x32x32xf32> to vector<32x32xf32>
    %cst_26 = arith.constant dense<0.000000e+00> : vector<8x32xf32>
    %48 = tpu.matmul %0, %47, %cst_26 {dimension_numbers = #tpu.dot_dimension_numbers<[1], [0], [0], [1], [0, 0, 1, 1], [], []>} : vector<8x32xf32>, vector<32x32xf32>, vector<8x32xf32> -> vector<8x32xf32>
    %49 = arith.mulf %45, %48 : vector<8x32xf32>
    %50 = arith.addf %44, %49 : vector<8x32xf32>
    %51 = arith.mulf %45, %3 : vector<8x32xf32>
    %c8 = arith.constant 8 : index
    %c0_27 = arith.constant 0 : index
    %c0_28 = arith.constant 0 : index
    %52 = vector.load %arg2[%c8, %c0_27, %c0_28] : memref<16x32x32xf32, #tpu.memory_space<vmem>>, vector<1x32x32xf32>
    %53 = vector.shape_cast %52 : vector<1x32x32xf32> to vector<32x32xf32>
    %cst_29 = arith.constant dense<0.000000e+00> : vector<8x32xf32>
    %54 = tpu.matmul %0, %53, %cst_29 {dimension_numbers = #tpu.dot_dimension_numbers<[1], [0], [0], [1], [0, 0, 1, 1], [], []>} : vector<8x32xf32>, vector<32x32xf32>, vector<8x32xf32> -> vector<8x32xf32>
    %55 = arith.mulf %51, %54 : vector<8x32xf32>
    %56 = arith.addf %50, %55 : vector<8x32xf32>
    %57 = arith.mulf %51, %3 : vector<8x32xf32>
    %c9 = arith.constant 9 : index
    %c0_30 = arith.constant 0 : index
    %c0_31 = arith.constant 0 : index
    %58 = vector.load %arg2[%c9, %c0_30, %c0_31] : memref<16x32x32xf32, #tpu.memory_space<vmem>>, vector<1x32x32xf32>
    %59 = vector.shape_cast %58 : vector<1x32x32xf32> to vector<32x32xf32>
    %cst_32 = arith.constant dense<0.000000e+00> : vector<8x32xf32>
    %60 = tpu.matmul %0, %59, %cst_32 {dimension_numbers = #tpu.dot_dimension_numbers<[1], [0], [0], [1], [0, 0, 1, 1], [], []>} : vector<8x32xf32>, vector<32x32xf32>, vector<8x32xf32> -> vector<8x32xf32>
    %61 = arith.mulf %57, %60 : vector<8x32xf32>
    %62 = arith.addf %56, %61 : vector<8x32xf32>
    %63 = arith.mulf %57, %3 : vector<8x32xf32>
    %c10 = arith.constant 10 : index
    %c0_33 = arith.constant 0 : index
    %c0_34 = arith.constant 0 : index
    %64 = vector.load %arg2[%c10, %c0_33, %c0_34] : memref<16x32x32xf32, #tpu.memory_space<vmem>>, vector<1x32x32xf32>
    %65 = vector.shape_cast %64 : vector<1x32x32xf32> to vector<32x32xf32>
    %cst_35 = arith.constant dense<0.000000e+00> : vector<8x32xf32>
    %66 = tpu.matmul %0, %65, %cst_35 {dimension_numbers = #tpu.dot_dimension_numbers<[1], [0], [0], [1], [0, 0, 1, 1], [], []>} : vector<8x32xf32>, vector<32x32xf32>, vector<8x32xf32> -> vector<8x32xf32>
    %67 = arith.mulf %63, %66 : vector<8x32xf32>
    %68 = arith.addf %62, %67 : vector<8x32xf32>
    %69 = arith.mulf %63, %3 : vector<8x32xf32>
    %c11 = arith.constant 11 : index
    %c0_36 = arith.constant 0 : index
    %c0_37 = arith.constant 0 : index
    %70 = vector.load %arg2[%c11, %c0_36, %c0_37] : memref<16x32x32xf32, #tpu.memory_space<vmem>>, vector<1x32x32xf32>
    %71 = vector.shape_cast %70 : vector<1x32x32xf32> to vector<32x32xf32>
    %cst_38 = arith.constant dense<0.000000e+00> : vector<8x32xf32>
    %72 = tpu.matmul %0, %71, %cst_38 {dimension_numbers = #tpu.dot_dimension_numbers<[1], [0], [0], [1], [0, 0, 1, 1], [], []>} : vector<8x32xf32>, vector<32x32xf32>, vector<8x32xf32> -> vector<8x32xf32>
    %73 = arith.mulf %69, %72 : vector<8x32xf32>
    %74 = arith.addf %68, %73 : vector<8x32xf32>
    %75 = arith.mulf %69, %3 : vector<8x32xf32>
    %c12 = arith.constant 12 : index
    %c0_39 = arith.constant 0 : index
    %c0_40 = arith.constant 0 : index
    %76 = vector.load %arg2[%c12, %c0_39, %c0_40] : memref<16x32x32xf32, #tpu.memory_space<vmem>>, vector<1x32x32xf32>
    %77 = vector.shape_cast %76 : vector<1x32x32xf32> to vector<32x32xf32>
    %cst_41 = arith.constant dense<0.000000e+00> : vector<8x32xf32>
    %78 = tpu.matmul %0, %77, %cst_41 {dimension_numbers = #tpu.dot_dimension_numbers<[1], [0], [0], [1], [0, 0, 1, 1], [], []>} : vector<8x32xf32>, vector<32x32xf32>, vector<8x32xf32> -> vector<8x32xf32>
    %79 = arith.mulf %75, %78 : vector<8x32xf32>
    %80 = arith.addf %74, %79 : vector<8x32xf32>
    %81 = arith.mulf %75, %3 : vector<8x32xf32>
    %c13 = arith.constant 13 : index
    %c0_42 = arith.constant 0 : index
    %c0_43 = arith.constant 0 : index
    %82 = vector.load %arg2[%c13, %c0_42, %c0_43] : memref<16x32x32xf32, #tpu.memory_space<vmem>>, vector<1x32x32xf32>
    %83 = vector.shape_cast %82 : vector<1x32x32xf32> to vector<32x32xf32>
    %cst_44 = arith.constant dense<0.000000e+00> : vector<8x32xf32>
    %84 = tpu.matmul %0, %83, %cst_44 {dimension_numbers = #tpu.dot_dimension_numbers<[1], [0], [0], [1], [0, 0, 1, 1], [], []>} : vector<8x32xf32>, vector<32x32xf32>, vector<8x32xf32> -> vector<8x32xf32>
    %85 = arith.mulf %81, %84 : vector<8x32xf32>
    %86 = arith.addf %80, %85 : vector<8x32xf32>
    %87 = arith.mulf %81, %3 : vector<8x32xf32>
    %c14 = arith.constant 14 : index
    %c0_45 = arith.constant 0 : index
    %c0_46 = arith.constant 0 : index
    %88 = vector.load %arg2[%c14, %c0_45, %c0_46] : memref<16x32x32xf32, #tpu.memory_space<vmem>>, vector<1x32x32xf32>
    %89 = vector.shape_cast %88 : vector<1x32x32xf32> to vector<32x32xf32>
    %cst_47 = arith.constant dense<0.000000e+00> : vector<8x32xf32>
    %90 = tpu.matmul %0, %89, %cst_47 {dimension_numbers = #tpu.dot_dimension_numbers<[1], [0], [0], [1], [0, 0, 1, 1], [], []>} : vector<8x32xf32>, vector<32x32xf32>, vector<8x32xf32> -> vector<8x32xf32>
    %91 = arith.mulf %87, %90 : vector<8x32xf32>
    %92 = arith.addf %86, %91 : vector<8x32xf32>
    %93 = arith.mulf %87, %3 : vector<8x32xf32>
    %c15 = arith.constant 15 : index
    %c0_48 = arith.constant 0 : index
    %c0_49 = arith.constant 0 : index
    %94 = vector.load %arg2[%c15, %c0_48, %c0_49] : memref<16x32x32xf32, #tpu.memory_space<vmem>>, vector<1x32x32xf32>
    %95 = vector.shape_cast %94 : vector<1x32x32xf32> to vector<32x32xf32>
    %cst_50 = arith.constant dense<0.000000e+00> : vector<8x32xf32>
    %96 = tpu.matmul %0, %95, %cst_50 {dimension_numbers = #tpu.dot_dimension_numbers<[1], [0], [0], [1], [0, 0, 1, 1], [], []>} : vector<8x32xf32>, vector<32x32xf32>, vector<8x32xf32> -> vector<8x32xf32>
    %97 = arith.mulf %93, %96 : vector<8x32xf32>
    %98 = arith.addf %92, %97 : vector<8x32xf32>
    %c0_51 = arith.constant 0 : index
    %c0_52 = arith.constant 0 : index
    %99 = vector.load %arg4[%c0_51, %c0_52] : memref<8x32xf32, #tpu.memory_space<vmem>>, vector<8x32xf32>
    tpu.vector_store %arg4[%c0_51, %c0_52], %98 {strides = array<i32>} : memref<8x32xf32, #tpu.memory_space<vmem>>, vector<8x32xf32>,
    return
  }
  func.func @transform_0(%arg0: i32) -> (i32, i32) {
    %c0_i32 = arith.constant 0 : i32
    %c0_i32_0 = arith.constant 0 : i32
    return %arg0, %c0_i32 : i32, i32
  }
  func.func @transform_1(%arg0: i32) -> (i32, i32, i32) {
    %c0_i32 = arith.constant 0 : i32
    %c0_i32_0 = arith.constant 0 : i32
    %c0_i32_1 = arith.constant 0 : i32
    %c0_i32_2 = arith.constant 0 : i32
    return %c0_i32, %c0_i32_0, %c0_i32_1 : i32, i32, i32
  }
  func.func @transform_2(%arg0: i32) -> (i32, i32) {
    %c0_i32 = arith.constant 0 : i32
    %c0_i32_0 = arith.constant 0 : i32
    return %arg0, %c0_i32 : i32, i32
  }
  func.func @transform_3(%arg0: i32) -> (i32, i32) {
    %c0_i32 = arith.constant 0 : i32
    %c0_i32_0 = arith.constant 0 : i32
    return %arg0, %c0_i32 : i32, i32
  }
}

</mosaic_0001>

<llo_original>
// kernel: linode_cell_forward.1
$region0: #{linode_cell_forward.1}
  #allocation0 [shape = 'u32[]', space=smem, size = 0x4, offset = 0x4, fixed_abs, tag = 'smem constant byte address 0x4 - core index']
  #allocation1 [shape = 'u32[144,128]{1,0:T(1,128)}', space=vmem, size = 0x12000, scoped, tag = 'internal scratch']
  %s0 = inlined_call_operand.vmem [shape: f32[8,1], index: 0, kind: input, shape index: {}]
  %s1 = inlined_call_operand.vmem [shape: f32[16,32,32], index: 1, kind: input, shape index: {}]
  %s2 = inlined_call_operand.vmem [shape: f32[8,32], index: 2, kind: input, shape index: {}]
  %s3 = inlined_call_operand.hbm [shape: f32[8,32], index: 3, kind: output, shape index: {}]
  %s4 = sld [smem:[#allocation0]]
  $region22: #{linode_cell_forward.1} parent=0
    _
  %s6 = ssub.s32 1, %s4
  %s7 = scalar_select 0, %s6, %s4
  $region1: #{linode_cell_forward.1} parent=0
    #allocation2 [shape = 'u8[4096]{0}', space=vmem, size = 0x1000, scoped, tag = 'output window, operand 0, single buffered']
    #allocation3 [shape = 's32[1]{0}', space=sflag, size = 0x4, scoped, tag = 'scoped memory for linode_cell_forward.1']
    %8 = vsyncpa [#allocation3], 0
    // Predicated region
    $region2: #{linode_cell_forward.1} parent=1 // pred_check
      _
    $region3: #{linode_cell_forward.1} parent=1 // pred_check_branch
      %10 = sbr.rel (0) target = $region5
    $region4: #{linode_cell_forward.1} parent=1 // pred_region
      _
    $region5: #{linode_cell_forward.1} parent=1 // pred_fallthru
      _
    // Predicated region
    $region6: #{linode_cell_forward.1} parent=1 // pred_check
      _
    $region7: #{linode_cell_forward.1} parent=1 // pred_check_branch
      %12 = sbr.rel (0) target = $region9
    $region8: #{linode_cell_forward.1} parent=1 // pred_region
      _
    $region9: #{linode_cell_forward.1} parent=1 // pred_fallthru
      _
    // Predicated region
    $region10: #{linode_cell_forward.1} parent=1 // pred_check
      _
    $region11: #{linode_cell_forward.1} parent=1 // pred_check_branch
      %14 = sbr.rel (0) target = $region13
    $region12: #{linode_cell_forward.1} parent=1 // pred_region
      _
    $region13: #{linode_cell_forward.1} parent=1 // pred_fallthru
      _
    %v15 = vld [vmem:[%s2] sm:$0xff]
    %v16 = vld [vmem:[%s0] sm:$0xff]
    %18 = vset.pattern.permute.xlu0 0
    %19 = vperm.xlu0 %18, %v16
    %v20 = vpop.permute.xlu0 %19
    %v22 = vld [vmem:[%s1] sm:$0xff]
    %v23 = vld [vmem:[%s1 + $0x8] sm:$0xff]
    %v24 = vld [vmem:[%s1 + $0x10] sm:$0xff]
    %v25 = vld [vmem:[%s1 + $0x18] sm:$0xff]
    %vm26 = vcmask 261120
    %v28 = vsel %vm26, %v15, 0
    %30 = vmatprep.subr.mxu0 0.0
    %31 = vmatpush1.msra.mxu0 0.0
    %32 = vmatprep.subr.mxu0 0.0
    %33 = vmatpush1.msra.mxu0 0.0
    %34 = vmatprep.subr.mxu0 0.0
    %35 = vmatpush1.msra.mxu0 0.0
    %36 = vmatprep.subr.mxu0 0.0
    %37 = vmatpush1.msra.mxu0 0.0
    %38 = vmatprep.subr.mxu0 0.0
    %39 = vmatpush1.msra.mxu0 0.0
    %40 = vmatprep.subr.mxu0 0.0
    %41 = vmatpush1.msra.mxu0 0.0
    %42 = vmatprep.subr.mxu0 0.0
    %43 = vmatpush1.msra.mxu0 0.0
    %44 = vmatprep.subr.mxu0 0.0
    %45 = vmatpush1.msra.mxu0 0.0
    %46 = vmatprep.subr.mxu0 0.0
    %47 = vmatpush1.msra.mxu0 0.0
    %48 = vmatprep.subr.mxu0 0.0
    %49 = vmatpush1.msra.mxu0 0.0
    %50 = vmatprep.subr.mxu0 0.0
    %51 = vmatpush1.msra.mxu0 0.0
    %52 = vmatprep.subr.mxu0 0.0
    %53 = vmatpush1.msra.mxu0 0.0
    %54 = vmatprep.subr.mxu0 0.0
    %55 = vmatpush1.msra.mxu0 %v25
    %56 = vmatprep.subr.mxu0 0.0
    %57 = vmatpush1.msra.mxu0 %v24
    %58 = vmatprep.subr.mxu0 0.0
    %59 = vmatpush1.msra.mxu0 %v23
    %60 = vmatprep.subr.mxu0 0.0
    %61 = vmatpush1.msra.mxu0 %v22
    %62 = vmatprep.subr.mxu0 0.0
    %63 = vmatpush2.msra.mxu0 0.0
    %64 = vmatprep.subr.mxu0 0.0
    %65 = vmatpush2.msra.mxu0 0.0
    %66 = vmatprep.subr.mxu0 0.0
    %67 = vmatpush2.msra.mxu0 0.0
    %68 = vmatprep.subr.mxu0 0.0
    %69 = vmatpush2.msra.mxu0 0.0
    %70 = vmatprep.subr.mxu0 0.0
    %71 = vmatpush2.msra.mxu0 0.0
    %72 = vmatprep.subr.mxu0 0.0
    %73 = vmatpush2.msra.mxu0 0.0
    %74 = vmatprep.subr.mxu0 0.0
    %75 = vmatpush2.msra.mxu0 0.0
    %76 = vmatprep.subr.mxu0 0.0
    %77 = vmatpush2.msra.mxu0 0.0
    %78 = vmatprep.subr.mxu0 0.0
    %79 = vmatpush2.msra.mxu0 0.0
    %80 = vmatprep.subr.mxu0 0.0
    %81 = vmatpush2.msra.mxu0 0.0
    %82 = vmatprep.subr.mxu0 0.0
    %83 = vmatpush2.msra.mxu0 0.0
    %84 = vmatprep.subr.mxu0 0.0
    %85 = vmatpush2.msra.mxu0 0.0
    %86 = vmatprep.subr.mxu0 0.0
    %87 = vmatpush2.msra.mxu0 0.0
    %88 = vmatprep.subr.mxu0 0.0
    %89 = vmatpush2.msra.mxu0 0.0
    %90 = vmatprep.subr.mxu0 0.0
    %91 = vmatpush2.msra.mxu0 0.0
    %92 = vmatprep.subr.mxu0 0.0
    %93 = vmatpush2.msra.mxu0 0.0
    %94 = vmatprep.mubr.f32.mxu0 0.0
    %95 = vmatmul.mubr.f32.gmra.mxu0 %v28
    %v96 = vpop.f32.mrf.mxu0
    %v97 = vadd.f32 0.0, %v96
    %v98 = vpop.f32.mrf.mxu0
    %99 = vdwg.mxu0
    %v100 = vmul.f32 %v20, %v97
    %v101 = vadd.f32 %v15, %v100
    %v102 = vmul.f32 %v20, %v20
    %s103 = scalar_lea.vmem %s1, 32
    %v104 = vld [vmem:[%s103] sm:$0xff]
    %v105 = vld [vmem:[%s103 + $0x8] sm:$0xff]
    %v106 = vld [vmem:[%s103 + $0x10] sm:$0xff]
    %v107 = vld [vmem:[%s103 + $0x18] sm:$0xff]
    %108 = vmatprep.subr.mxu0 0.0
    %109 = vmatpush1.msra.mxu0 0.0
    %110 = vmatprep.subr.mxu0 0.0
    %111 = vmatpush1.msra.mxu0 0.0
    %112 = vmatprep.subr.mxu0 0.0
    %113 = vmatpush1.msra.mxu0 0.0
    %114 = vmatprep.subr.mxu0 0.0
    %115 = vmatpush1.msra.mxu0 0.0
    %116 = vmatprep.subr.mxu0 0.0
    %117 = vmatpush1.msra.mxu0 0.0
    %118 = vmatprep.subr.mxu0 0.0
    %119 = vmatpush1.msra.mxu0 0.0
    %120 = vmatprep.subr.mxu0 0.0
    %121 = vmatpush1.msra.mxu0 0.0
    %122 = vmatprep.subr.mxu0 0.0
    %123 = vmatpush1.msra.mxu0 0.0
    %124 = vmatprep.subr.mxu0 0.0
    %125 = vmatpush1.msra.mxu0 0.0
    %126 = vmatprep.subr.mxu0 0.0
    %127 = vmatpush1.msra.mxu0 0.0
    %128 = vmatprep.subr.mxu0 0.0
    %129 = vmatpush1.msra.mxu0 0.0
    %130 = vmatprep.subr.mxu0 0.0
    %131 = vmatpush1.msra.mxu0 0.0
    %132 = vmatprep.subr.mxu0 0.0
    %133 = vmatpush1.msra.mxu0 %v107
    %134 = vmatprep.subr.mxu0 0.0
    %135 = vmatpush1.msra.mxu0 %v106
    %136 = vmatprep.subr.mxu0 0.0
    %137 = vmatpush1.msra.mxu0 %v105
    %138 = vmatprep.subr.mxu0 0.0
    %139 = vmatpush1.msra.mxu0 %v104
    %140 = vmatprep.subr.mxu0 0.0
    %141 = vmatpush2.msra.mxu0 0.0
    %142 = vmatprep.subr.mxu0 0.0
    %143 = vmatpush2.msra.mxu0 0.0
    %144 = vmatprep.subr.mxu0 0.0
    %145 = vmatpush2.msra.mxu0 0.0
    %146 = vmatprep.subr.mxu0 0.0
    %147 = vmatpush2.msra.mxu0 0.0
    %148 = vmatprep.subr.mxu0 0.0
    %149 = vmatpush2.msra.mxu0 0.0
    %150 = vmatprep.subr.mxu0 0.0
    %151 = vmatpush2.msra.mxu0 0.0
    %152 = vmatprep.subr.mxu0 0.0
    %153 = vmatpush2.msra.mxu0 0.0
    %154 = vmatprep.subr.mxu0 0.0
    %155 = vmatpush2.msra.mxu0 0.0
    %156 = vmatprep.subr.mxu0 0.0
    %157 = vmatpush2.msra.mxu0 0.0
    %158 = vmatprep.subr.mxu0 0.0
    %159 = vmatpush2.msra.mxu0 0.0
    %160 = vmatprep.subr.mxu0 0.0
    %161 = vmatpush2.msra.mxu0 0.0
    %162 = vmatprep.subr.mxu0 0.0
    %163 = vmatpush2.msra.mxu0 0.0
    %164 = vmatprep.subr.mxu0 0.0
    %165 = vmatpush2.msra.mxu0 0.0
    %166 = vmatprep.subr.mxu0 0.0
    %167 = vmatpush2.msra.mxu0 0.0
    %168 = vmatprep.subr.mxu0 0.0
    %169 = vmatpush2.msra.mxu0 0.0
    %170 = vmatprep.subr.mxu0 0.0
    %171 = vmatpush2.msra.mxu0 0.0
    %172 = vmatprep.mubr.f32.mxu0 0.0
    %173 = vmatmul.mubr.f32.gmra.mxu0 %v28
    %v174 = vpop.f32.mrf.mxu0
    %v175 = vadd.f32 0.0, %v174
    %v176 = vpop.f32.mrf.mxu0
    %177 = vdwg.mxu0
    %v178 = vmul.f32 %v102, %v175
    %v179 = vadd.f32 %v101, %v178
    %v180 = vmul.f32 %v102, %v20
    %s181 = scalar_lea.vmem %s1, 64
    %v182 = vld [vmem:[%s181] sm:$0xff]
    %v183 = vld [vmem:[%s181 + $0x8] sm:$0xff]
    %v184 = vld [vmem:[%s181 + $0x10] sm:$0xff]
    %v185 = vld [vmem:[%s181 + $0x18] sm:$0xff]
    %186 = vmatprep.subr.mxu0 0.0
    %187 = vmatpush1.msra.mxu0 0.0
    %188 = vmatprep.subr.mxu0 0.0
    %189 = vmatpush1.msra.mxu0 0.0
    %190 = vmatprep.subr.mxu0 0.0
    %191 = vmatpush1.msra.mxu0 0.0
    %192 = vmatprep.subr.mxu0 0.0
    %193 = vmatpush1.msra.mxu0 0.0
    %194 = vmatprep.subr.mxu0 0.0
    %195 = vmatpush1.msra.mxu0 0.0
    %196 = vmatprep.subr.mxu0 0.0
    %197 = vmatpush1.msra.mxu0 0.0
    %198 = vmatprep.subr.mxu0 0.0
    %199 = vmatpush1.msra.mxu0 0.0
    %200 = vmatprep.subr.mxu0 0.0
    %201 = vmatpush1.msra.mxu0 0.0
    %202 = vmatprep.subr.mxu0 0.0
    %203 = vmatpush1.msra.mxu0 0.0
    %204 = vmatprep.subr.mxu0 0.0
    %205 = vmatpush1.msra.mxu0 0.0
    %206 = vmatprep.subr.mxu0 0.0
    %207 = vmatpush1.msra.mxu0 0.0
    %208 = vmatprep.subr.mxu0 0.0
    %209 = vmatpush1.msra.mxu0 0.0
    %210 = vmatprep.subr.mxu0 0.0
    %211 = vmatpush1.msra.mxu0 %v185
    %212 = vmatprep.subr.mxu0 0.0
    %213 = vmatpush1.msra.mxu0 %v184
    %214 = vmatprep.subr.mxu0 0.0
    %215 = vmatpush1.msra.mxu0 %v183
    %216 = vmatprep.subr.mxu0 0.0
    %217 = vmatpush1.msra.mxu0 %v182
    %218 = vmatprep.subr.mxu0 0.0
    %219 = vmatpush2.msra.mxu0 0.0
    %220 = vmatprep.subr.mxu0 0.0
    %221 = vmatpush2.msra.mxu0 0.0
    %222 = vmatprep.subr.mxu0 0.0
    %223 = vmatpush2.msra.mxu0 0.0
    %224 = vmatprep.subr.mxu0 0.0
    %225 = vmatpush2.msra.mxu0 0.0
    %226 = vmatprep.subr.mxu0 0.0
    %227 = vmatpush2.msra.mxu0 0.0
    %228 = vmatprep.subr.mxu0 0.0
    %229 = vmatpush2.msra.mxu0 0.0
    %230 = vmatprep.subr.mxu0 0.0
    %231 = vmatpush2.msra.mxu0 0.0
    %232 = vmatprep.subr.mxu0 0.0
    %233 = vmatpush2.msra.mxu0 0.0
    %234 = vmatprep.subr.mxu0 0.0
    %235 = vmatpush2.msra.mxu0 0.0
    %236 = vmatprep.subr.mxu0 0.0
    %237 = vmatpush2.msra.mxu0 0.0
    %238 = vmatprep.subr.mxu0 0.0
    %239 = vmatpush2.msra.mxu0 0.0
    %240 = vmatprep.subr.mxu0 0.0
    %241 = vmatpush2.msra.mxu0 0.0
    %242 = vmatprep.subr.mxu0 0.0
    %243 = vmatpush2.msra.mxu0 0.0
    %244 = vmatprep.subr.mxu0 0.0
    %245 = vmatpush2.msra.mxu0 0.0
    %246 = vmatprep.subr.mxu0 0.0
    %247 = vmatpush2.msra.mxu0 0.0
    %248 = vmatprep.subr.mxu0 0.0
    %249 = vmatpush2.msra.mxu0 0.0
    %250 = vmatprep.mubr.f32.mxu0 0.0
    %251 = vmatmul.mubr.f32.gmra.mxu0 %v28
    %v252 = vpop.f32.mrf.mxu0
    %v253 = vadd.f32 0.0, %v252
    %v254 = vpop.f32.mrf.mxu0
    %255 = vdwg.mxu0
    %v256 = vmul.f32 %v180, %v253
    %v257 = vadd.f32 %v179, %v256
    %v258 = vmul.f32 %v180, %v20
    %s259 = scalar_lea.vmem %s1, 96
    %v260 = vld [vmem:[%s259] sm:$0xff]
    %v261 = vld [vmem:[%s259 + $0x8] sm:$0xff]
    %v262 = vld [vmem:[%s259 + $0x10] sm:$0xff]
    %v263 = vld [vmem:[%s259 + $0x18] sm:$0xff]
    %264 = vmatprep.subr.mxu0 0.0
    %265 = vmatpush1.msra.mxu0 0.0
    %266 = vmatprep.subr.mxu0 0.0
    %267 = vmatpush1.msra.mxu0 0.0
    %268 = vmatprep.subr.mxu0 0.0
    %269 = vmatpush1.msra.mxu0 0.0
    %270 = vmatprep.subr.mxu0 0.0
    %271 = vmatpush1.msra.mxu0 0.0
    %272 = vmatprep.subr.mxu0 0.0
    %273 = vmatpush1.msra.mxu0 0.0
    %274 = vmatprep.subr.mxu0 0.0
    %275 = vmatpush1.msra.mxu0 0.0
    %276 = vmatprep.subr.mxu0 0.0
    %277 = vmatpush1.msra.mxu0 0.0
    %278 = vmatprep.subr.mxu0 0.0
    %279 = vmatpush1.msra.mxu0 0.0
    %280 = vmatprep.subr.mxu0 0.0
    %281 = vmatpush1.msra.mxu0 0.0
    %282 = vmatprep.subr.mxu0 0.0
    %283 = vmatpush1.msra.mxu0 0.0
    %284 = vmatprep.subr.mxu0 0.0
    %285 = vmatpush1.msra.mxu0 0.0
    %286 = vmatprep.subr.mxu0 0.0
    %287 = vmatpush1.msra.mxu0 0.0
    %288 = vmatprep.subr.mxu0 0.0
    %289 = vmatpush1.msra.mxu0 %v263
    %290 = vmatprep.subr.mxu0 0.0
    %291 = vmatpush1.msra.mxu0 %v262
    %292 = vmatprep.subr.mxu0 0.0
    %293 = vmatpush1.msra.mxu0 %v261
    %294 = vmatprep.subr.mxu0 0.0
    %295 = vmatpush1.msra.mxu0 %v260
    %296 = vmatprep.subr.mxu0 0.0
    %297 = vmatpush2.msra.mxu0 0.0
    %298 = vmatprep.subr.mxu0 0.0
    %299 = vmatpush2.msra.mxu0 0.0
    %300 = vmatprep.subr.mxu0 0.0
    %301 = vmatpush2.msra.mxu0 0.0
    %302 = vmatprep.subr.mxu0 0.0
    %303 = vmatpush2.msra.mxu0 0.0
    %304 = vmatprep.subr.mxu0 0.0
    %305 = vmatpush2.msra.mxu0 0.0
    %306 = vmatprep.subr.mxu0 0.0
    %307 = vmatpush2.msra.mxu0 0.0
    %308 = vmatprep.subr.mxu0 0.0
    %309 = vmatpush2.msra.mxu0 0.0
    %310 = vmatprep.subr.mxu0 0.0
    %311 = vmatpush2.msra.mxu0 0.0
    %312 = vmatprep.subr.mxu0 0.0
    %313 = vmatpush2.msra.mxu0 0.0
    %314 = vmatprep.subr.mxu0 0.0
    %315 = vmatpush2.msra.mxu0 0.0
    %316 = vmatprep.subr.mxu0 0.0
    %317 = vmatpush2.msra.mxu0 0.0
    %318 = vmatprep.subr.mxu0 0.0
    %319 = vmatpush2.msra.mxu0 0.0
    %320 = vmatprep.subr.mxu0 0.0
    %321 = vmatpush2.msra.mxu0 0.0
    %322 = vmatprep.subr.mxu0 0.0
    %323 = vmatpush2.msra.mxu0 0.0
    %324 = vmatprep.subr.mxu0 0.0
    %325 = vmatpush2.msra.mxu0 0.0
    %326 = vmatprep.subr.mxu0 0.0
    %327 = vmatpush2.msra.mxu0 0.0
    %328 = vmatprep.mubr.f32.mxu0 0.0
    %329 = vmatmul.mubr.f32.gmra.mxu0 %v28
    %v330 = vpop.f32.mrf.mxu0
    %v331 = vadd.f32 0.0, %v330
    %v332 = vpop.f32.mrf.mxu0
    %333 = vdwg.mxu0
    %v334 = vmul.f32 %v258, %v331
    %v335 = vadd.f32 %v257, %v334
    %v336 = vmul.f32 %v258, %v20
    %s337 = scalar_lea.vmem %s1, 128
    %v338 = vld [vmem:[%s337] sm:$0xff]
    %v339 = vld [vmem:[%s337 + $0x8] sm:$0xff]
    %v340 = vld [vmem:[%s337 + $0x10] sm:$0xff]
    %v341 = vld [vmem:[%s337 + $0x18] sm:$0xff]
    %342 = vmatprep.subr.mxu0 0.0
    %343 = vmatpush1.msra.mxu0 0.0
    %344 = vmatprep.subr.mxu0 0.0
    %345 = vmatpush1.msra.mxu0 0.0
    %346 = vmatprep.subr.mxu0 0.0
    %347 = vmatpush1.msra.mxu0 0.0
    %348 = vmatprep.subr.mxu0 0.0
    %349 = vmatpush1.msra.mxu0 0.0
    %350 = vmatprep.subr.mxu0 0.0
    %351 = vmatpush1.msra.mxu0 0.0
    %352 = vmatprep.subr.mxu0 0.0
    %353 = vmatpush1.msra.mxu0 0.0
    %354 = vmatprep.subr.mxu0 0.0
    %355 = vmatpush1.msra.mxu0 0.0
    %356 = vmatprep.subr.mxu0 0.0
    %357 = vmatpush1.msra.mxu0 0.0
    %358 = vmatprep.subr.mxu0 0.0
    %359 = vmatpush1.msra.mxu0 0.0
    %360 = vmatprep.subr.mxu0 0.0
    %361 = vmatpush1.msra.mxu0 0.0
    %362 = vmatprep.subr.mxu0 0.0
    %363 = vmatpush1.msra.mxu0 0.0
    %364 = vmatprep.subr.mxu0 0.0
    %365 = vmatpush1.msra.mxu0 0.0
    %366 = vmatprep.subr.mxu0 0.0
    %367 = vmatpush1.msra.mxu0 %v341
    %368 = vmatprep.subr.mxu0 0.0
    %369 = vmatpush1.msra.mxu0 %v340
    %370 = vmatprep.subr.mxu0 0.0
    %371 = vmatpush1.msra.mxu0 %v339
    %372 = vmatprep.subr.mxu0 0.0
    %373 = vmatpush1.msra.mxu0 %v338
    %374 = vmatprep.subr.mxu0 0.0
    %375 = vmatpush2.msra.mxu0 0.0
    %376 = vmatprep.subr.mxu0 0.0
    %377 = vmatpush2.msra.mxu0 0.0
    %378 = vmatprep.subr.mxu0 0.0
    %379 = vmatpush2.msra.mxu0 0.0
    %380 = vmatprep.subr.mxu0 0.0
    %381 = vmatpush2.msra.mxu0 0.0
    %382 = vmatprep.subr.mxu0 0.0
    %383 = vmatpush2.msra.mxu0 0.0
    %384 = vmatprep.subr.mxu0 0.0
    %385 = vmatpush2.msra.mxu0 0.0
    %386 = vmatprep.subr.mxu0 0.0
    %387 = vmatpush2.msra.mxu0 0.0
    %388 = vmatprep.subr.mxu0 0.0
    %389 = vmatpush2.msra.mxu0 0.0
    %390 = vmatprep.subr.mxu0 0.0
    %391 = vmatpush2.msra.mxu0 0.0
    %392 = vmatprep.subr.mxu0 0.0
    %393 = vmatpush2.msra.mxu0 0.0
    %394 = vmatprep.subr.mxu0 0.0
    %395 = vmatpush2.msra.mxu0 0.0
    %396 = vmatprep.subr.mxu0 0.0
    %397 = vmatpush2.msra.mxu0 0.0
    %398 = vmatprep.subr.mxu0 0.0
    %399 = vmatpush2.msra.mxu0 0.0
    %400 = vmatprep.subr.mxu0 0.0
    %401 = vmatpush2.msra.mxu0 0.0
    %402 = vmatprep.subr.mxu0 0.0
    %403 = vmatpush2.msra.mxu0 0.0
    %404 = vmatprep.subr.mxu0 0.0
    %405 = vmatpush2.msra.mxu0 0.0
    %406 = vmatprep.mubr.f32.mxu0 0.0
    %407 = vmatmul.mubr.f32.gmra.mxu0 %v28
    %v408 = vpop.f32.mrf.mxu0
    %v409 = vadd.f32 0.0, %v408
    %v410 = vpop.f32.mrf.mxu0
    %411 = vdwg.mxu0
    %v412 = vmul.f32 %v336, %v409
    %v413 = vadd.f32 %v335, %v412
    %v414 = vmul.f32 %v336, %v20
    %s415 = scalar_lea.vmem %s1, 160
    %v416 = vld [vmem:[%s415] sm:$0xff]
    %v417 = vld [vmem:[%s415 + $0x8] sm:$0xff]
    %v418 = vld [vmem:[%s415 + $0x10] sm:$0xff]
    %v419 = vld [vmem:[%s415 + $0x18] sm:$0xff]
    %420 = vmatprep.subr.mxu0 0.0
    %421 = vmatpush1.msra.mxu0 0.0
    %422 = vmatprep.subr.mxu0 0.0
    %423 = vmatpush1.msra.mxu0 0.0
    %424 = vmatprep.subr.mxu0 0.0
    %425 = vmatpush1.msra.mxu0 0.0
    %426 = vmatprep.subr.mxu0 0.0
    %427 = vmatpush1.msra.mxu0 0.0
    %428 = vmatprep.subr.mxu0 0.0
    %429 = vmatpush1.msra.mxu0 0.0
    %430 = vmatprep.subr.mxu0 0.0
    %431 = vmatpush1.msra.mxu0 0.0
    %432 = vmatprep.subr.mxu0 0.0
    %433 = vmatpush1.msra.mxu0 0.0
    %434 = vmatprep.subr.mxu0 0.0
    %435 = vmatpush1.msra.mxu0 0.0
    %436 = vmatprep.subr.mxu0 0.0
    %437 = vmatpush1.msra.mxu0 0.0
    %438 = vmatprep.subr.mxu0 0.0
    %439 = vmatpush1.msra.mxu0 0.0
    %440 = vmatprep.subr.mxu0 0.0
    %441 = vmatpush1.msra.mxu0 0.0
    %442 = vmatprep.subr.mxu0 0.0
    %443 = vmatpush1.msra.mxu0 0.0
    %444 = vmatprep.subr.mxu0 0.0
    %445 = vmatpush1.msra.mxu0 %v419
    %446 = vmatprep.subr.mxu0 0.0
    %447 = vmatpush1.msra.mxu0 %v418
    %448 = vmatprep.subr.mxu0 0.0
    %449 = vmatpush1.msra.mxu0 %v417
    %450 = vmatprep.subr.mxu0 0.0
    %451 = vmatpush1.msra.mxu0 %v416
    %452 = vmatprep.subr.mxu0 0.0
    %453 = vmatpush2.msra.mxu0 0.0
    %454 = vmatprep.subr.mxu0 0.0
    %455 = vmatpush2.msra.mxu0 0.0
    %456 = vmatprep.subr.mxu0 0.0
    %457 = vmatpush2.msra.mxu0 0.0
    %458 = vmatprep.subr.mxu0 0.0
    %459 = vmatpush2.msra.mxu0 0.0
    %460 = vmatprep.subr.mxu0 0.0
    %461 = vmatpush2.msra.mxu0 0.0
    %462 = vmatprep.subr.mxu0 0.0
    %463 = vmatpush2.msra.mxu0 0.0
    %464 = vmatprep.subr.mxu0 0.0
    %465 = vmatpush2.msra.mxu0 0.0
    %466 = vmatprep.subr.mxu0 0.0
    %467 = vmatpush2.msra.mxu0 0.0
    %468 = vmatprep.subr.mxu0 0.0
    %469 = vmatpush2.msra.mxu0 0.0
    %470 = vmatprep.subr.mxu0 0.0
    %471 = vmatpush2.msra.mxu0 0.0
    %472 = vmatprep.subr.mxu0 0.0
    %473 = vmatpush2.msra.mxu0 0.0
    %474 = vmatprep.subr.mxu0 0.0
    %475 = vmatpush2.msra.mxu0 0.0
    %476 = vmatprep.subr.mxu0 0.0
    %477 = vmatpush2.msra.mxu0 0.0
    %478 = vmatprep.subr.mxu0 0.0
    %479 = vmatpush2.msra.mxu0 0.0
    %480 = vmatprep.subr.mxu0 0.0
    %481 = vmatpush2.msra.mxu0 0.0
    %482 = vmatprep.subr.mxu0 0.0
    %483 = vmatpush2.msra.mxu0 0.0
    %484 = vmatprep.mubr.f32.mxu0 0.0
    %485 = vmatmul.mubr.f32.gmra.mxu0 %v28
    %v486 = vpop.f32.mrf.mxu0
    %v487 = vadd.f32 0.0, %v486
    %v488 = vpop.f32.mrf.mxu0
    %489 = vdwg.mxu0
    %v490 = vmul.f32 %v414, %v487
    %v491 = vadd.f32 %v413, %v490
    %v492 = vmul.f32 %v414, %v20
    %s493 = scalar_lea.vmem %s1, 192
    %v494 = vld [vmem:[%s493] sm:$0xff]
    %v495 = vld [vmem:[%s493 + $0x8] sm:$0xff]
    %v496 = vld [vmem:[%s493 + $0x10] sm:$0xff]
    %v497 = vld [vmem:[%s493 + $0x18] sm:$0xff]
    %498 = vmatprep.subr.mxu0 0.0
    %499 = vmatpush1.msra.mxu0 0.0
    %500 = vmatprep.subr.mxu0 0.0
    %501 = vmatpush1.msra.mxu0 0.0
    %502 = vmatprep.subr.mxu0 0.0
    %503 = vmatpush1.msra.mxu0 0.0
    %504 = vmatprep.subr.mxu0 0.0
    %505 = vmatpush1.msra.mxu0 0.0
    %506 = vmatprep.subr.mxu0 0.0
    %507 = vmatpush1.msra.mxu0 0.0
    %508 = vmatprep.subr.mxu0 0.0
    %509 = vmatpush1.msra.mxu0 0.0
    %510 = vmatprep.subr.mxu0 0.0
    %511 = vmatpush1.msra.mxu0 0.0
    %512 = vmatprep.subr.mxu0 0.0
    %513 = vmatpush1.msra.mxu0 0.0
    %514 = vmatprep.subr.mxu0 0.0
    %515 = vmatpush1.msra.mxu0 0.0
    %516 = vmatprep.subr.mxu0 0.0
    %517 = vmatpush1.msra.mxu0 0.0
    %518 = vmatprep.subr.mxu0 0.0
    %519 = vmatpush1.msra.mxu0 0.0
    %520 = vmatprep.subr.mxu0 0.0
    %521 = vmatpush1.msra.mxu0 0.0
    %522 = vmatprep.subr.mxu0 0.0
    %523 = vmatpush1.msra.mxu0 %v497
    %524 = vmatprep.subr.mxu0 0.0
    %525 = vmatpush1.msra.mxu0 %v496
    %526 = vmatprep.subr.mxu0 0.0
    %527 = vmatpush1.msra.mxu0 %v495
    %528 = vmatprep.subr.mxu0 0.0
    %529 = vmatpush1.msra.mxu0 %v494
    %530 = vmatprep.subr.mxu0 0.0
    %531 = vmatpush2.msra.mxu0 0.0
    %532 = vmatprep.subr.mxu0 0.0
    %533 = vmatpush2.msra.mxu0 0.0
    %534 = vmatprep.subr.mxu0 0.0
    %535 = vmatpush2.msra.mxu0 0.0
    %536 = vmatprep.subr.mxu0 0.0
    %537 = vmatpush2.msra.mxu0 0.0
    %538 = vmatprep.subr.mxu0 0.0
    %539 = vmatpush2.msra.mxu0 0.0
    %540 = vmatprep.subr.mxu0 0.0
    %541 = vmatpush2.msra.mxu0 0.0
    %542 = vmatprep.subr.mxu0 0.0
    %543 = vmatpush2.msra.mxu0 0.0
    %544 = vmatprep.subr.mxu0 0.0
    %545 = vmatpush2.msra.mxu0 0.0
    %546 = vmatprep.subr.mxu0 0.0
    %547 = vmatpush2.msra.mxu0 0.0
    %548 = vmatprep.subr.mxu0 0.0
    %549 = vmatpush2.msra.mxu0 0.0
    %550 = vmatprep.subr.mxu0 0.0
    %551 = vmatpush2.msra.mxu0 0.0
    %552 = vmatprep.subr.mxu0 0.0
    %553 = vmatpush2.msra.mxu0 0.0
    %554 = vmatprep.subr.mxu0 0.0
    %555 = vmatpush2.msra.mxu0 0.0
    %556 = vmatprep.subr.mxu0 0.0
    %557 = vmatpush2.msra.mxu0 0.0
    %558 = vmatprep.subr.mxu0 0.0
    %559 = vmatpush2.msra.mxu0 0.0
    %560 = vmatprep.subr.mxu0 0.0
    %561 = vmatpush2.msra.mxu0 0.0
    %562 = vmatprep.mubr.f32.mxu0 0.0
    %563 = vmatmul.mubr.f32.gmra.mxu0 %v28
    %v564 = vpop.f32.mrf.mxu0
    %v565 = vadd.f32 0.0, %v564
    %v566 = vpop.f32.mrf.mxu0
    %567 = vdwg.mxu0
    %v568 = vmul.f32 %v492, %v565
    %v569 = vadd.f32 %v491, %v568
    %v570 = vmul.f32 %v492, %v20
    %s571 = scalar_lea.vmem %s1, 224
    %v572 = vld [vmem:[%s571] sm:$0xff]
    %v573 = vld [vmem:[%s571 + $0x8] sm:$0xff]
    %v574 = vld [vmem:[%s571 + $0x10] sm:$0xff]
    %v575 = vld [vmem:[%s571 + $0x18] sm:$0xff]
    %576 = vmatprep.subr.mxu0 0.0
    %577 = vmatpush1.msra.mxu0 0.0
    %578 = vmatprep.subr.mxu0 0.0
    %579 = vmatpush1.msra.mxu0 0.0
    %580 = vmatprep.subr.mxu0 0.0
    %581 = vmatpush1.msra.mxu0 0.0
    %582 = vmatprep.subr.mxu0 0.0
    %583 = vmatpush1.msra.mxu0 0.0
    %584 = vmatprep.subr.mxu0 0.0
    %585 = vmatpush1.msra.mxu0 0.0
    %586 = vmatprep.subr.mxu0 0.0
    %587 = vmatpush1.msra.mxu0 0.0
    %588 = vmatprep.subr.mxu0 0.0
    %589 = vmatpush1.msra.mxu0 0.0
    %590 = vmatprep.subr.mxu0 0.0
    %591 = vmatpush1.msra.mxu0 0.0
    %592 = vmatprep.subr.mxu0 0.0
    %593 = vmatpush1.msra.mxu0 0.0
    %594 = vmatprep.subr.mxu0 0.0
    %595 = vmatpush1.msra.mxu0 0.0
    %596 = vmatprep.subr.mxu0 0.0
    %597 = vmatpush1.msra.mxu0 0.0
    %598 = vmatprep.subr.mxu0 0.0
    %599 = vmatpush1.msra.mxu0 0.0
    %600 = vmatprep.subr.mxu0 0.0
    %601 = vmatpush1.msra.mxu0 %v575
    %602 = vmatprep.subr.mxu0 0.0
    %603 = vmatpush1.msra.mxu0 %v574
    %604 = vmatprep.subr.mxu0 0.0
    %605 = vmatpush1.msra.mxu0 %v573
    %606 = vmatprep.subr.mxu0 0.0
    %607 = vmatpush1.msra.mxu0 %v572
    %608 = vmatprep.subr.mxu0 0.0
    %609 = vmatpush2.msra.mxu0 0.0
    %610 = vmatprep.subr.mxu0 0.0
    %611 = vmatpush2.msra.mxu0 0.0
    %612 = vmatprep.subr.mxu0 0.0
    %613 = vmatpush2.msra.mxu0 0.0
    %614 = vmatprep.subr.mxu0 0.0
    %615 = vmatpush2.msra.mxu0 0.0
    %616 = vmatprep.subr.mxu0 0.0
    %617 = vmatpush2.msra.mxu0 0.0
    %618 = vmatprep.subr.mxu0 0.0
    %619 = vmatpush2.msra.mxu0 0.0
    %620 = vmatprep.subr.mxu0 0.0
    %621 = vmatpush2.msra.mxu0 0.0
    %622 = vmatprep.subr.mxu0 0.0
    %623 = vmatpush2.msra.mxu0 0.0
    %624 = vmatprep.subr.mxu0 0.0
    %625 = vmatpush2.msra.mxu0 0.0
    %626 = vmatprep.subr.mxu0 0.0
    %627 = vmatpush2.msra.mxu0 0.0
    %628 = vmatprep.subr.mxu0 0.0
    %629 = vmatpush2.msra.mxu0 0.0
    %630 = vmatprep.subr.mxu0 0.0
    %631 = vmatpush2.msra.mxu0 0.0
    %632 = vmatprep.subr.mxu0 0.0
    %633 = vmatpush2.msra.mxu0 0.0
    %634 = vmatprep.subr.mxu0 0.0
    %635 = vmatpush2.msra.mxu0 0.0
    %636 = vmatprep.subr.mxu0 0.0
    %637 = vmatpush2.msra.mxu0 0.0
    %638 = vmatprep.subr.mxu0 0.0
    %639 = vmatpush2.msra.mxu0 0.0
    %640 = vmatprep.mubr.f32.mxu0 0.0
    %641 = vmatmul.mubr.f32.gmra.mxu0 %v28
    %v642 = vpop.f32.mrf.mxu0
    %v643 = vadd.f32 0.0, %v642
    %v644 = vpop.f32.mrf.mxu0
    %645 = vdwg.mxu0
    %v646 = vmul.f32 %v570, %v643
    %v647 = vadd.f32 %v569, %v646
    %v648 = vmul.f32 %v570, %v20
    %s649 = scalar_lea.vmem %s1, 256
    %v650 = vld [vmem:[%s649] sm:$0xff]
    %v651 = vld [vmem:[%s649 + $0x8] sm:$0xff]
    %v652 = vld [vmem:[%s649 + $0x10] sm:$0xff]
    %v653 = vld [vmem:[%s649 + $0x18] sm:$0xff]
    %654 = vmatprep.subr.mxu0 0.0
    %655 = vmatpush1.msra.mxu0 0.0
    %656 = vmatprep.subr.mxu0 0.0
    %657 = vmatpush1.msra.mxu0 0.0
    %658 = vmatprep.subr.mxu0 0.0
    %659 = vmatpush1.msra.mxu0 0.0
    %660 = vmatprep.subr.mxu0 0.0
    %661 = vmatpush1.msra.mxu0 0.0
    %662 = vmatprep.subr.mxu0 0.0
    %663 = vmatpush1.msra.mxu0 0.0
    %664 = vmatprep.subr.mxu0 0.0
    %665 = vmatpush1.msra.mxu0 0.0
    %666 = vmatprep.subr.mxu0 0.0
    %667 = vmatpush1.msra.mxu0 0.0
    %668 = vmatprep.subr.mxu0 0.0
    %669 = vmatpush1.msra.mxu0 0.0
    %670 = vmatprep.subr.mxu0 0.0
    %671 = vmatpush1.msra.mxu0 0.0
    %672 = vmatprep.subr.mxu0 0.0
    %673 = vmatpush1.msra.mxu0 0.0
    %674 = vmatprep.subr.mxu0 0.0
    %675 = vmatpush1.msra.mxu0 0.0
    %676 = vmatprep.subr.mxu0 0.0
    %677 = vmatpush1.msra.mxu0 0.0
    %678 = vmatprep.subr.mxu0 0.0
    %679 = vmatpush1.msra.mxu0 %v653
    %680 = vmatprep.subr.mxu0 0.0
    %681 = vmatpush1.msra.mxu0 %v652
    %682 = vmatprep.subr.mxu0 0.0
    %683 = vmatpush1.msra.mxu0 %v651
    %684 = vmatprep.subr.mxu0 0.0
    %685 = vmatpush1.msra.mxu0 %v650
    %686 = vmatprep.subr.mxu0 0.0
    %687 = vmatpush2.msra.mxu0 0.0
    %688 = vmatprep.subr.mxu0 0.0
    %689 = vmatpush2.msra.mxu0 0.0
    %690 = vmatprep.subr.mxu0 0.0
    %691 = vmatpush2.msra.mxu0 0.0
    %692 = vmatprep.subr.mxu0 0.0
    %693 = vmatpush2.msra.mxu0 0.0
    %694 = vmatprep.subr.mxu0 0.0
    %695 = vmatpush2.msra.mxu0 0.0
    %696 = vmatprep.subr.mxu0 0.0
    %697 = vmatpush2.msra.mxu0 0.0
    %698 = vmatprep.subr.mxu0 0.0
    %699 = vmatpush2.msra.mxu0 0.0
    %700 = vmatprep.subr.mxu0 0.0
    %701 = vmatpush2.msra.mxu0 0.0
    %702 = vmatprep.subr.mxu0 0.0
    %703 = vmatpush2.msra.mxu0 0.0
    %704 = vmatprep.subr.mxu0 0.0
    %705 = vmatpush2.msra.mxu0 0.0
    %706 = vmatprep.subr.mxu0 0.0
    %707 = vmatpush2.msra.mxu0 0.0
    %708 = vmatprep.subr.mxu0 0.0
    %709 = vmatpush2.msra.mxu0 0.0
    %710 = vmatprep.subr.mxu0 0.0
    %711 = vmatpush2.msra.mxu0 0.0
    %712 = vmatprep.subr.mxu0 0.0
    %713 = vmatpush2.msra.mxu0 0.0
    %714 = vmatprep.subr.mxu0 0.0
    %715 = vmatpush2.msra.mxu0 0.0
    %716 = vmatprep.subr.mxu0 0.0
    %717 = vmatpush2.msra.mxu0 0.0
    %718 = vmatprep.mubr.f32.mxu0 0.0
    %719 = vmatmul.mubr.f32.gmra.mxu0 %v28
    %v720 = vpop.f32.mrf.mxu0
    %v721 = vadd.f32 0.0, %v720
    %v722 = vpop.f32.mrf.mxu0
    %723 = vdwg.mxu0
    %v724 = vmul.f32 %v648, %v721
    %v725 = vadd.f32 %v647, %v724
    %v726 = vmul.f32 %v648, %v20
    %s727 = scalar_lea.vmem %s1, 288
    %v728 = vld [vmem:[%s727] sm:$0xff]
    %v729 = vld [vmem:[%s727 + $0x8] sm:$0xff]
    %v730 = vld [vmem:[%s727 + $0x10] sm:$0xff]
    %v731 = vld [vmem:[%s727 + $0x18] sm:$0xff]
    %732 = vmatprep.subr.mxu0 0.0
    %733 = vmatpush1.msra.mxu0 0.0
    %734 = vmatprep.subr.mxu0 0.0
    %735 = vmatpush1.msra.mxu0 0.0
    %736 = vmatprep.subr.mxu0 0.0
    %737 = vmatpush1.msra.mxu0 0.0
    %738 = vmatprep.subr.mxu0 0.0
    %739 = vmatpush1.msra.mxu0 0.0
    %740 = vmatprep.subr.mxu0 0.0
    %741 = vmatpush1.msra.mxu0 0.0
    %742 = vmatprep.subr.mxu0 0.0
    %743 = vmatpush1.msra.mxu0 0.0
    %744 = vmatprep.subr.mxu0 0.0
    %745 = vmatpush1.msra.mxu0 0.0
    %746 = vmatprep.subr.mxu0 0.0
    %747 = vmatpush1.msra.mxu0 0.0
    %748 = vmatprep.subr.mxu0 0.0
    %749 = vmatpush1.msra.mxu0 0.0
    %750 = vmatprep.subr.mxu0 0.0
    %751 = vmatpush1.msra.mxu0 0.0
    %752 = vmatprep.subr.mxu0 0.0
    %753 = vmatpush1.msra.mxu0 0.0
    %754 = vmatprep.subr.mxu0 0.0
    %755 = vmatpush1.msra.mxu0 0.0
    %756 = vmatprep.subr.mxu0 0.0
    %757 = vmatpush1.msra.mxu0 %v731
    %758 = vmatprep.subr.mxu0 0.0
    %759 = vmatpush1.msra.mxu0 %v730
    %760 = vmatprep.subr.mxu0 0.0
    %761 = vmatpush1.msra.mxu0 %v729
    %762 = vmatprep.subr.mxu0 0.0
    %763 = vmatpush1.msra.mxu0 %v728
    %764 = vmatprep.subr.mxu0 0.0
    %765 = vmatpush2.msra.mxu0 0.0
    %766 = vmatprep.subr.mxu0 0.0
    %767 = vmatpush2.msra.mxu0 0.0
    %768 = vmatprep.subr.mxu0 0.0
    %769 = vmatpush2.msra.mxu0 0.0
    %770 = vmatprep.subr.mxu0 0.0
    %771 = vmatpush2.msra.mxu0 0.0
    %772 = vmatprep.subr.mxu0 0.0
    %773 = vmatpush2.msra.mxu0 0.0
    %774 = vmatprep.subr.mxu0 0.0
    %775 = vmatpush2.msra.mxu0 0.0
    %776 = vmatprep.subr.mxu0 0.0
    %777 = vmatpush2.msra.mxu0 0.0
    %778 = vmatprep.subr.mxu0 0.0
    %779 = vmatpush2.msra.mxu0 0.0
    %780 = vmatprep.subr.mxu0 0.0
    %781 = vmatpush2.msra.mxu0 0.0
    %782 = vmatprep.subr.mxu0 0.0
    %783 = vmatpush2.msra.mxu0 0.0
    %784 = vmatprep.subr.mxu0 0.0
    %785 = vmatpush2.msra.mxu0 0.0
    %786 = vmatprep.subr.mxu0 0.0
    %787 = vmatpush2.msra.mxu0 0.0
    %788 = vmatprep.subr.mxu0 0.0
    %789 = vmatpush2.msra.mxu0 0.0
    %790 = vmatprep.subr.mxu0 0.0
    %791 = vmatpush2.msra.mxu0 0.0
    %792 = vmatprep.subr.mxu0 0.0
    %793 = vmatpush2.msra.mxu0 0.0
    %794 = vmatprep.subr.mxu0 0.0
    %795 = vmatpush2.msra.mxu0 0.0
    %796 = vmatprep.mubr.f32.mxu0 0.0
    %797 = vmatmul.mubr.f32.gmra.mxu0 %v28
    %v798 = vpop.f32.mrf.mxu0
    %v799 = vadd.f32 0.0, %v798
    %v800 = vpop.f32.mrf.mxu0
    %801 = vdwg.mxu0
    %v802 = vmul.f32 %v726, %v799
    %v803 = vadd.f32 %v725, %v802
    %v804 = vmul.f32 %v726, %v20
    %s805 = scalar_lea.vmem %s1, 320
    %v806 = vld [vmem:[%s805] sm:$0xff]
    %v807 = vld [vmem:[%s805 + $0x8] sm:$0xff]
    %v808 = vld [vmem:[%s805 + $0x10] sm:$0xff]
    %v809 = vld [vmem:[%s805 + $0x18] sm:$0xff]
    %810 = vmatprep.subr.mxu0 0.0
    %811 = vmatpush1.msra.mxu0 0.0
    %812 = vmatprep.subr.mxu0 0.0
    %813 = vmatpush1.msra.mxu0 0.0
    %814 = vmatprep.subr.mxu0 0.0
    %815 = vmatpush1.msra.mxu0 0.0
    %816 = vmatprep.subr.mxu0 0.0
    %817 = vmatpush1.msra.mxu0 0.0
    %818 = vmatprep.subr.mxu0 0.0
    %819 = vmatpush1.msra.mxu0 0.0
    %820 = vmatprep.subr.mxu0 0.0
    %821 = vmatpush1.msra.mxu0 0.0
    %822 = vmatprep.subr.mxu0 0.0
    %823 = vmatpush1.msra.mxu0 0.0
    %824 = vmatprep.subr.mxu0 0.0
    %825 = vmatpush1.msra.mxu0 0.0
    %826 = vmatprep.subr.mxu0 0.0
    %827 = vmatpush1.msra.mxu0 0.0
    %828 = vmatprep.subr.mxu0 0.0
    %829 = vmatpush1.msra.mxu0 0.0
    %830 = vmatprep.subr.mxu0 0.0
    %831 = vmatpush1.msra.mxu0 0.0
    %832 = vmatprep.subr.mxu0 0.0
    %833 = vmatpush1.msra.mxu0 0.0
    %834 = vmatprep.subr.mxu0 0.0
    %835 = vmatpush1.msra.mxu0 %v809
    %836 = vmatprep.subr.mxu0 0.0
    %837 = vmatpush1.msra.mxu0 %v808
    %838 = vmatprep.subr.mxu0 0.0
    %839 = vmatpush1.msra.mxu0 %v807
    %840 = vmatprep.subr.mxu0 0.0
    %841 = vmatpush1.msra.mxu0 %v806
    %842 = vmatprep.subr.mxu0 0.0
    %843 = vmatpush2.msra.mxu0 0.0
    %844 = vmatprep.subr.mxu0 0.0
    %845 = vmatpush2.msra.mxu0 0.0
    %846 = vmatprep.subr.mxu0 0.0
    %847 = vmatpush2.msra.mxu0 0.0
    %848 = vmatprep.subr.mxu0 0.0
    %849 = vmatpush2.msra.mxu0 0.0
    %850 = vmatprep.subr.mxu0 0.0
    %851 = vmatpush2.msra.mxu0 0.0
    %852 = vmatprep.subr.mxu0 0.0
    %853 = vmatpush2.msra.mxu0 0.0
    %854 = vmatprep.subr.mxu0 0.0
    %855 = vmatpush2.msra.mxu0 0.0
    %856 = vmatprep.subr.mxu0 0.0
    %857 = vmatpush2.msra.mxu0 0.0
    %858 = vmatprep.subr.mxu0 0.0
    %859 = vmatpush2.msra.mxu0 0.0
    %860 = vmatprep.subr.mxu0 0.0
    %861 = vmatpush2.msra.mxu0 0.0
    %862 = vmatprep.subr.mxu0 0.0
    %863 = vmatpush2.msra.mxu0 0.0
    %864 = vmatprep.subr.mxu0 0.0
    %865 = vmatpush2.msra.mxu0 0.0
    %866 = vmatprep.subr.mxu0 0.0
    %867 = vmatpush2.msra.mxu0 0.0
    %868 = vmatprep.subr.mxu0 0.0
    %869 = vmatpush2.msra.mxu0 0.0
    %870 = vmatprep.subr.mxu0 0.0
    %871 = vmatpush2.msra.mxu0 0.0
    %872 = vmatprep.subr.mxu0 0.0
    %873 = vmatpush2.msra.mxu0 0.0
    %874 = vmatprep.mubr.f32.mxu0 0.0
    %875 = vmatmul.mubr.f32.gmra.mxu0 %v28
    %v876 = vpop.f32.mrf.mxu0
    %v877 = vadd.f32 0.0, %v876
    %v878 = vpop.f32.mrf.mxu0
    %879 = vdwg.mxu0
    %v880 = vmul.f32 %v804, %v877
    %v881 = vadd.f32 %v803, %v880
    %v882 = vmul.f32 %v804, %v20
    %s883 = scalar_lea.vmem %s1, 352
    %v884 = vld [vmem:[%s883] sm:$0xff]
    %v885 = vld [vmem:[%s883 + $0x8] sm:$0xff]
    %v886 = vld [vmem:[%s883 + $0x10] sm:$0xff]
    %v887 = vld [vmem:[%s883 + $0x18] sm:$0xff]
    %888 = vmatprep.subr.mxu0 0.0
    %889 = vmatpush1.msra.mxu0 0.0
    %890 = vmatprep.subr.mxu0 0.0
    %891 = vmatpush1.msra.mxu0 0.0
    %892 = vmatprep.subr.mxu0 0.0
    %893 = vmatpush1.msra.mxu0 0.0
    %894 = vmatprep.subr.mxu0 0.0
    %895 = vmatpush1.msra.mxu0 0.0
    %896 = vmatprep.subr.mxu0 0.0
    %897 = vmatpush1.msra.mxu0 0.0
    %898 = vmatprep.subr.mxu0 0.0
    %899 = vmatpush1.msra.mxu0 0.0
    %900 = vmatprep.subr.mxu0 0.0
    %901 = vmatpush1.msra.mxu0 0.0
    %902 = vmatprep.subr.mxu0 0.0
    %903 = vmatpush1.msra.mxu0 0.0
    %904 = vmatprep.subr.mxu0 0.0
    %905 = vmatpush1.msra.mxu0 0.0
    %906 = vmatprep.subr.mxu0 0.0
    %907 = vmatpush1.msra.mxu0 0.0
    %908 = vmatprep.subr.mxu0 0.0
    %909 = vmatpush1.msra.mxu0 0.0
    %910 = vmatprep.subr.mxu0 0.0
    %911 = vmatpush1.msra.mxu0 0.0
    %912 = vmatprep.subr.mxu0 0.0
    %913 = vmatpush1.msra.mxu0 %v887
    %914 = vmatprep.subr.mxu0 0.0
    %915 = vmatpush1.msra.mxu0 %v886
    %916 = vmatprep.subr.mxu0 0.0
    %917 = vmatpush1.msra.mxu0 %v885
    %918 = vmatprep.subr.mxu0 0.0
    %919 = vmatpush1.msra.mxu0 %v884
    %920 = vmatprep.subr.mxu0 0.0
    %921 = vmatpush2.msra.mxu0 0.0
    %922 = vmatprep.subr.mxu0 0.0
    %923 = vmatpush2.msra.mxu0 0.0
    %924 = vmatprep.subr.mxu0 0.0
    %925 = vmatpush2.msra.mxu0 0.0
    %926 = vmatprep.subr.mxu0 0.0
    %927 = vmatpush2.msra.mxu0 0.0
    %928 = vmatprep.subr.mxu0 0.0
    %929 = vmatpush2.msra.mxu0 0.0
    %930 = vmatprep.subr.mxu0 0.0
    %931 = vmatpush2.msra.mxu0 0.0
    %932 = vmatprep.subr.mxu0 0.0
    %933 = vmatpush2.msra.mxu0 0.0
    %934 = vmatprep.subr.mxu0 0.0
    %935 = vmatpush2.msra.mxu0 0.0
    %936 = vmatprep.subr.mxu0 0.0
    %937 = vmatpush2.msra.mxu0 0.0
    %938 = vmatprep.subr.mxu0 0.0
    %939 = vmatpush2.msra.mxu0 0.0
    %940 = vmatprep.subr.mxu0 0.0
    %941 = vmatpush2.msra.mxu0 0.0
    %942 = vmatprep.subr.mxu0 0.0
    %943 = vmatpush2.msra.mxu0 0.0
    %944 = vmatprep.subr.mxu0 0.0
    %945 = vmatpush2.msra.mxu0 0.0
    %946 = vmatprep.subr.mxu0 0.0
    %947 = vmatpush2.msra.mxu0 0.0
    %948 = vmatprep.subr.mxu0 0.0
    %949 = vmatpush2.msra.mxu0 0.0
    %950 = vmatprep.subr.mxu0 0.0
    %951 = vmatpush2.msra.mxu0 0.0
    %952 = vmatprep.mubr.f32.mxu0 0.0
    %953 = vmatmul.mubr.f32.gmra.mxu0 %v28
    %v954 = vpop.f32.mrf.mxu0
    %v955 = vadd.f32 0.0, %v954
    %v956 = vpop.f32.mrf.mxu0
    %957 = vdwg.mxu0
    %v958 = vmul.f32 %v882, %v955
    %v959 = vadd.f32 %v881, %v958
    %v960 = vmul.f32 %v882, %v20
    %s961 = scalar_lea.vmem %s1, 384
    %v962 = vld [vmem:[%s961] sm:$0xff]
    %v963 = vld [vmem:[%s961 + $0x8] sm:$0xff]
    %v964 = vld [vmem:[%s961 + $0x10] sm:$0xff]
    %v965 = vld [vmem:[%s961 + $0x18] sm:$0xff]
    %966 = vmatprep.subr.mxu0 0.0
    %967 = vmatpush1.msra.mxu0 0.0
    %968 = vmatprep.subr.mxu0 0.0
    %969 = vmatpush1.msra.mxu0 0.0
    %970 = vmatprep.subr.mxu0 0.0
    %971 = vmatpush1.msra.mxu0 0.0
    %972 = vmatprep.subr.mxu0 0.0
    %973 = vmatpush1.msra.mxu0 0.0
    %974 = vmatprep.subr.mxu0 0.0
    %975 = vmatpush1.msra.mxu0 0.0
    %976 = vmatprep.subr.mxu0 0.0
    %977 = vmatpush1.msra.mxu0 0.0
    %978 = vmatprep.subr.mxu0 0.0
    %979 = vmatpush1.msra.mxu0 0.0
    %980 = vmatprep.subr.mxu0 0.0
    %981 = vmatpush1.msra.mxu0 0.0
    %982 = vmatprep.subr.mxu0 0.0
    %983 = vmatpush1.msra.mxu0 0.0
    %984 = vmatprep.subr.mxu0 0.0
    %985 = vmatpush1.msra.mxu0 0.0
    %986 = vmatprep.subr.mxu0 0.0
    %987 = vmatpush1.msra.mxu0 0.0
    %988 = vmatprep.subr.mxu0 0.0
    %989 = vmatpush1.msra.mxu0 0.0
    %990 = vmatprep.subr.mxu0 0.0
    %991 = vmatpush1.msra.mxu0 %v965
    %992 = vmatprep.subr.mxu0 0.0
    %993 = vmatpush1.msra.mxu0 %v964
    %994 = vmatprep.subr.mxu0 0.0
    %995 = vmatpush1.msra.mxu0 %v963
    %996 = vmatprep.subr.mxu0 0.0
    %997 = vmatpush1.msra.mxu0 %v962
    %998 = vmatprep.subr.mxu0 0.0
    %999 = vmatpush2.msra.mxu0 0.0
    %1000 = vmatprep.subr.mxu0 0.0
    %1001 = vmatpush2.msra.mxu0 0.0
    %1002 = vmatprep.subr.mxu0 0.0
    %1003 = vmatpush2.msra.mxu0 0.0
    %1004 = vmatprep.subr.mxu0 0.0
    %1005 = vmatpush2.msra.mxu0 0.0
    %1006 = vmatprep.subr.mxu0 0.0
    %1007 = vmatpush2.msra.mxu0 0.0
    %1008 = vmatprep.subr.mxu0 0.0
    %1009 = vmatpush2.msra.mxu0 0.0
    %1010 = vmatprep.subr.mxu0 0.0
    %1011 = vmatpush2.msra.mxu0 0.0
    %1012 = vmatprep.subr.mxu0 0.0
    %1013 = vmatpush2.msra.mxu0 0.0
    %1014 = vmatprep.subr.mxu0 0.0
    %1015 = vmatpush2.msra.mxu0 0.0
    %1016 = vmatprep.subr.mxu0 0.0
    %1017 = vmatpush2.msra.mxu0 0.0
    %1018 = vmatprep.subr.mxu0 0.0
    %1019 = vmatpush2.msra.mxu0 0.0
    %1020 = vmatprep.subr.mxu0 0.0
    %1021 = vmatpush2.msra.mxu0 0.0
    %1022 = vmatprep.subr.mxu0 0.0
    %1023 = vmatpush2.msra.mxu0 0.0
    %1024 = vmatprep.subr.mxu0 0.0
    %1025 = vmatpush2.msra.mxu0 0.0
    %1026 = vmatprep.subr.mxu0 0.0
    %1027 = vmatpush2.msra.mxu0 0.0
    %1028 = vmatprep.subr.mxu0 0.0
    %1029 = vmatpush2.msra.mxu0 0.0
    %1030 = vmatprep.mubr.f32.mxu0 0.0
    %1031 = vmatmul.mubr.f32.gmra.mxu0 %v28
    %v1032 = vpop.f32.mrf.mxu0
    %v1033 = vadd.f32 0.0, %v1032
    %v1034 = vpop.f32.mrf.mxu0
    %1035 = vdwg.mxu0
    %v1036 = vmul.f32 %v960, %v1033
    %v1037 = vadd.f32 %v959, %v1036
    %v1038 = vmul.f32 %v960, %v20
    %s1039 = scalar_lea.vmem %s1, 416
    %v1040 = vld [vmem:[%s1039] sm:$0xff]
    %v1041 = vld [vmem:[%s1039 + $0x8] sm:$0xff]
    %v1042 = vld [vmem:[%s1039 + $0x10] sm:$0xff]
    %v1043 = vld [vmem:[%s1039 + $0x18] sm:$0xff]
    %1044 = vmatprep.subr.mxu0 0.0
    %1045 = vmatpush1.msra.mxu0 0.0
    %1046 = vmatprep.subr.mxu0 0.0
    %1047 = vmatpush1.msra.mxu0 0.0
    %1048 = vmatprep.subr.mxu0 0.0
    %1049 = vmatpush1.msra.mxu0 0.0
    %1050 = vmatprep.subr.mxu0 0.0
    %1051 = vmatpush1.msra.mxu0 0.0
    %1052 = vmatprep.subr.mxu0 0.0
    %1053 = vmatpush1.msra.mxu0 0.0
    %1054 = vmatprep.subr.mxu0 0.0
    %1055 = vmatpush1.msra.mxu0 0.0
    %1056 = vmatprep.subr.mxu0 0.0
    %1057 = vmatpush1.msra.mxu0 0.0
    %1058 = vmatprep.subr.mxu0 0.0
    %1059 = vmatpush1.msra.mxu0 0.0
    %1060 = vmatprep.subr.mxu0 0.0
    %1061 = vmatpush1.msra.mxu0 0.0
    %1062 = vmatprep.subr.mxu0 0.0
    %1063 = vmatpush1.msra.mxu0 0.0
    %1064 = vmatprep.subr.mxu0 0.0
    %1065 = vmatpush1.msra.mxu0 0.0
    %1066 = vmatprep.subr.mxu0 0.0
    %1067 = vmatpush1.msra.mxu0 0.0
    %1068 = vmatprep.subr.mxu0 0.0
    %1069 = vmatpush1.msra.mxu0 %v1043
    %1070 = vmatprep.subr.mxu0 0.0
    %1071 = vmatpush1.msra.mxu0 %v1042
    %1072 = vmatprep.subr.mxu0 0.0
    %1073 = vmatpush1.msra.mxu0 %v1041
    %1074 = vmatprep.subr.mxu0 0.0
    %1075 = vmatpush1.msra.mxu0 %v1040
    %1076 = vmatprep.subr.mxu0 0.0
    %1077 = vmatpush2.msra.mxu0 0.0
    %1078 = vmatprep.subr.mxu0 0.0
    %1079 = vmatpush2.msra.mxu0 0.0
    %1080 = vmatprep.subr.mxu0 0.0
    %1081 = vmatpush2.msra.mxu0 0.0
    %1082 = vmatprep.subr.mxu0 0.0
    %1083 = vmatpush2.msra.mxu0 0.0
    %1084 = vmatprep.subr.mxu0 0.0
    %1085 = vmatpush2.msra.mxu0 0.0
    %1086 = vmatprep.subr.mxu0 0.0
    %1087 = vmatpush2.msra.mxu0 0.0
    %1088 = vmatprep.subr.mxu0 0.0
    %1089 = vmatpush2.msra.mxu0 0.0
    %1090 = vmatprep.subr.mxu0 0.0
    %1091 = vmatpush2.msra.mxu0 0.0
    %1092 = vmatprep.subr.mxu0 0.0
    %1093 = vmatpush2.msra.mxu0 0.0
    %1094 = vmatprep.subr.mxu0 0.0
    %1095 = vmatpush2.msra.mxu0 0.0
    %1096 = vmatprep.subr.mxu0 0.0
    %1097 = vmatpush2.msra.mxu0 0.0
    %1098 = vmatprep.subr.mxu0 0.0
    %1099 = vmatpush2.msra.mxu0 0.0
    %1100 = vmatprep.subr.mxu0 0.0
    %1101 = vmatpush2.msra.mxu0 0.0
    %1102 = vmatprep.subr.mxu0 0.0
    %1103 = vmatpush2.msra.mxu0 0.0
    %1104 = vmatprep.subr.mxu0 0.0
    %1105 = vmatpush2.msra.mxu0 0.0
    %1106 = vmatprep.subr.mxu0 0.0
    %1107 = vmatpush2.msra.mxu0 0.0
    %1108 = vmatprep.mubr.f32.mxu0 0.0
    %1109 = vmatmul.mubr.f32.gmra.mxu0 %v28
    %v1110 = vpop.f32.mrf.mxu0
    %v1111 = vadd.f32 0.0, %v1110
    %v1112 = vpop.f32.mrf.mxu0
    %1113 = vdwg.mxu0
    %v1114 = vmul.f32 %v1038, %v1111
    %v1115 = vadd.f32 %v1037, %v1114
    %v1116 = vmul.f32 %v1038, %v20
    %s1117 = scalar_lea.vmem %s1, 448
    %v1118 = vld [vmem:[%s1117] sm:$0xff]
    %v1119 = vld [vmem:[%s1117 + $0x8] sm:$0xff]
    %v1120 = vld [vmem:[%s1117 + $0x10] sm:$0xff]
    %v1121 = vld [vmem:[%s1117 + $0x18] sm:$0xff]
    %1122 = vmatprep.subr.mxu0 0.0
    %1123 = vmatpush1.msra.mxu0 0.0
    %1124 = vmatprep.subr.mxu0 0.0
    %1125 = vmatpush1.msra.mxu0 0.0
    %1126 = vmatprep.subr.mxu0 0.0
    %1127 = vmatpush1.msra.mxu0 0.0
    %1128 = vmatprep.subr.mxu0 0.0
    %1129 = vmatpush1.msra.mxu0 0.0
    %1130 = vmatprep.subr.mxu0 0.0
    %1131 = vmatpush1.msra.mxu0 0.0
    %1132 = vmatprep.subr.mxu0 0.0
    %1133 = vmatpush1.msra.mxu0 0.0
    %1134 = vmatprep.subr.mxu0 0.0
    %1135 = vmatpush1.msra.mxu0 0.0
    %1136 = vmatprep.subr.mxu0 0.0
    %1137 = vmatpush1.msra.mxu0 0.0
    %1138 = vmatprep.subr.mxu0 0.0
    %1139 = vmatpush1.msra.mxu0 0.0
    %1140 = vmatprep.subr.mxu0 0.0
    %1141 = vmatpush1.msra.mxu0 0.0
    %1142 = vmatprep.subr.mxu0 0.0
    %1143 = vmatpush1.msra.mxu0 0.0
    %1144 = vmatprep.subr.mxu0 0.0
    %1145 = vmatpush1.msra.mxu0 0.0
    %1146 = vmatprep.subr.mxu0 0.0
    %1147 = vmatpush1.msra.mxu0 %v1121
    %1148 = vmatprep.subr.mxu0 0.0
    %1149 = vmatpush1.msra.mxu0 %v1120
    %1150 = vmatprep.subr.mxu0 0.0
    %1151 = vmatpush1.msra.mxu0 %v1119
    %1152 = vmatprep.subr.mxu0 0.0
    %1153 = vmatpush1.msra.mxu0 %v1118
    %1154 = vmatprep.subr.mxu0 0.0
    %1155 = vmatpush2.msra.mxu0 0.0
    %1156 = vmatprep.subr.mxu0 0.0
    %1157 = vmatpush2.msra.mxu0 0.0
    %1158 = vmatprep.subr.mxu0 0.0
    %1159 = vmatpush2.msra.mxu0 0.0
    %1160 = vmatprep.subr.mxu0 0.0
    %1161 = vmatpush2.msra.mxu0 0.0
    %1162 = vmatprep.subr.mxu0 0.0
    %1163 = vmatpush2.msra.mxu0 0.0
    %1164 = vmatprep.subr.mxu0 0.0
    %1165 = vmatpush2.msra.mxu0 0.0
    %1166 = vmatprep.subr.mxu0 0.0
    %1167 = vmatpush2.msra.mxu0 0.0
    %1168 = vmatprep.subr.mxu0 0.0
    %1169 = vmatpush2.msra.mxu0 0.0
    %1170 = vmatprep.subr.mxu0 0.0
    %1171 = vmatpush2.msra.mxu0 0.0
    %1172 = vmatprep.subr.mxu0 0.0
    %1173 = vmatpush2.msra.mxu0 0.0
    %1174 = vmatprep.subr.mxu0 0.0
    %1175 = vmatpush2.msra.mxu0 0.0
    %1176 = vmatprep.subr.mxu0 0.0
    %1177 = vmatpush2.msra.mxu0 0.0
    %1178 = vmatprep.subr.mxu0 0.0
    %1179 = vmatpush2.msra.mxu0 0.0
    %1180 = vmatprep.subr.mxu0 0.0
    %1181 = vmatpush2.msra.mxu0 0.0
    %1182 = vmatprep.subr.mxu0 0.0
    %1183 = vmatpush2.msra.mxu0 0.0
    %1184 = vmatprep.subr.mxu0 0.0
    %1185 = vmatpush2.msra.mxu0 0.0
    %1186 = vmatprep.mubr.f32.mxu0 0.0
    %1187 = vmatmul.mubr.f32.gmra.mxu0 %v28
    %v1188 = vpop.f32.mrf.mxu0
    %v1189 = vadd.f32 0.0, %v1188
    %v1190 = vpop.f32.mrf.mxu0
    %1191 = vdwg.mxu0
    %v1192 = vmul.f32 %v1116, %v1189
    %v1193 = vadd.f32 %v1115, %v1192
    %v1194 = vmul.f32 %v1116, %v20
    %s1195 = scalar_lea.vmem %s1, 480
    %v1196 = vld [vmem:[%s1195] sm:$0xff]
    %v1197 = vld [vmem:[%s1195 + $0x8] sm:$0xff]
    %v1198 = vld [vmem:[%s1195 + $0x10] sm:$0xff]
    %v1199 = vld [vmem:[%s1195 + $0x18] sm:$0xff]
    %1200 = vmatprep.subr.mxu0 0.0
    %1201 = vmatpush1.msra.mxu0 0.0
    %1202 = vmatprep.subr.mxu0 0.0
    %1203 = vmatpush1.msra.mxu0 0.0
    %1204 = vmatprep.subr.mxu0 0.0
    %1205 = vmatpush1.msra.mxu0 0.0
    %1206 = vmatprep.subr.mxu0 0.0
    %1207 = vmatpush1.msra.mxu0 0.0
    %1208 = vmatprep.subr.mxu0 0.0
    %1209 = vmatpush1.msra.mxu0 0.0
    %1210 = vmatprep.subr.mxu0 0.0
    %1211 = vmatpush1.msra.mxu0 0.0
    %1212 = vmatprep.subr.mxu0 0.0
    %1213 = vmatpush1.msra.mxu0 0.0
    %1214 = vmatprep.subr.mxu0 0.0
    %1215 = vmatpush1.msra.mxu0 0.0
    %1216 = vmatprep.subr.mxu0 0.0
    %1217 = vmatpush1.msra.mxu0 0.0
    %1218 = vmatprep.subr.mxu0 0.0
    %1219 = vmatpush1.msra.mxu0 0.0
    %1220 = vmatprep.subr.mxu0 0.0
    %1221 = vmatpush1.msra.mxu0 0.0
    %1222 = vmatprep.subr.mxu0 0.0
    %1223 = vmatpush1.msra.mxu0 0.0
    %1224 = vmatprep.subr.mxu0 0.0
    %1225 = vmatpush1.msra.mxu0 %v1199
    %1226 = vmatprep.subr.mxu0 0.0
    %1227 = vmatpush1.msra.mxu0 %v1198
    %1228 = vmatprep.subr.mxu0 0.0
    %1229 = vmatpush1.msra.mxu0 %v1197
    %1230 = vmatprep.subr.mxu0 0.0
    %1231 = vmatpush1.msra.mxu0 %v1196
    %1232 = vmatprep.subr.mxu0 0.0
    %1233 = vmatpush2.msra.mxu0 0.0
    %1234 = vmatprep.subr.mxu0 0.0
    %1235 = vmatpush2.msra.mxu0 0.0
    %1236 = vmatprep.subr.mxu0 0.0
    %1237 = vmatpush2.msra.mxu0 0.0
    %1238 = vmatprep.subr.mxu0 0.0
    %1239 = vmatpush2.msra.mxu0 0.0
    %1240 = vmatprep.subr.mxu0 0.0
    %1241 = vmatpush2.msra.mxu0 0.0
    %1242 = vmatprep.subr.mxu0 0.0
    %1243 = vmatpush2.msra.mxu0 0.0
    %1244 = vmatprep.subr.mxu0 0.0
    %1245 = vmatpush2.msra.mxu0 0.0
    %1246 = vmatprep.subr.mxu0 0.0
    %1247 = vmatpush2.msra.mxu0 0.0
    %1248 = vmatprep.subr.mxu0 0.0
    %1249 = vmatpush2.msra.mxu0 0.0
    %1250 = vmatprep.subr.mxu0 0.0
    %1251 = vmatpush2.msra.mxu0 0.0
    %1252 = vmatprep.subr.mxu0 0.0
    %1253 = vmatpush2.msra.mxu0 0.0
    %1254 = vmatprep.subr.mxu0 0.0
    %1255 = vmatpush2.msra.mxu0 0.0
    %1256 = vmatprep.subr.mxu0 0.0
    %1257 = vmatpush2.msra.mxu0 0.0
    %1258 = vmatprep.subr.mxu0 0.0
    %1259 = vmatpush2.msra.mxu0 0.0
    %1260 = vmatprep.subr.mxu0 0.0
    %1261 = vmatpush2.msra.mxu0 0.0
    %1262 = vmatprep.subr.mxu0 0.0
    %1263 = vmatpush2.msra.mxu0 0.0
    %1264 = vmatprep.mubr.f32.mxu0 0.0
    %1265 = vmatmul.mubr.f32.gmra.mxu0 %v28
    %v1266 = vpop.f32.mrf.mxu0
    %v1267 = vadd.f32 0.0, %v1266
    %v1268 = vpop.f32.mrf.mxu0
    %1269 = vdwg.mxu0
    %v1270 = vmul.f32 %v1194, %v1267
    %v1271 = vadd.f32 %v1193, %v1270
    %1272 = vst.msk [vmem:[#allocation2] sm:$0xff] %vm26, %v1271
    // Predicated region
    $region14: #{linode_cell_forward.1} parent=1 // pred_check
      _
    $region15: #{linode_cell_forward.1} parent=1 // pred_check_branch
      %1274 = sbr.rel (0) target = $region17
    $region16: #{linode_cell_forward.1} parent=1 // pred_region
      %s1276 = ssub.s32 128, 128
      %1277 = vsyncadd [#allocation3], %s1276
      %s1279 = sshll.u32 [#allocation2], 4
      %s1280 = int_to_ptr.vmem [resolvable:$true] %s1279
      %1282 = dma.vmem_to_hbm [thread:$0]  %s1280, 128, %s3, [#allocation3]
    $region17: #{linode_cell_forward.1} parent=1 // pred_fallthru
      _
    // Predicated region
    $region18: #{linode_cell_forward.1} parent=1 // pred_check
      _
    $region19: #{linode_cell_forward.1} parent=1 // pred_check_branch
      %1284 = sbr.rel (0) target = $region21
    $region20: #{linode_cell_forward.1} parent=1 // pred_region
      %1285 = dma.done [#allocation3], 128
    $region21: #{linode_cell_forward.1} parent=1 // pred_fallthru
      _
    %1286 = vsyncpa [#allocation3], 1

</llo_original>
